<compile_context>
chip_gen: v6e
topology: v6e:2x2x1
jax: 0.10.0
libtpu: 0.0.40
codegen_flags: <defaults>
</compile_context>

<pallas_src>
import functools

import jax
import jax.numpy as jnp
from jax.experimental import pallas as pl
from jax.experimental.pallas import tpu as pltpu

EPS = 1e-5
CIN = 3
COUT = 64
NTAPS = 9 * CIN                 # 27 taps (kh, kw, cin)
KPAD = 32                       # contraction dim padded to a sublane multiple
VMEM_LIMIT = 48 * 1024 * 1024   # <= v7x's 64 MiB; comfortable on v5e/v6e (128 MiB)
DEFAULT_TILE_PX = 32 * 1024     # target output pixels per grid step


def _round_up(x, m):
    return (x + m - 1) // m * m


def _cdiv(a, b):
    return -(-a // b)


def _pick_tiling(n, px_per_img, tile_px):
    """Balanced image-granularity tiles; >= 2 tiles when N >= 2 (v7x has 2 TensorCores)."""
    imgs_per_tile_cap = max(1, tile_px // px_per_img)
    min_tiles = 2 if n >= 2 else 1
    num_tiles = max(min_tiles, _cdiv(n, imgs_per_tile_cap))
    tn = _cdiv(n, num_tiles)
    num_tiles = _cdiv(n, tn)
    return tn, num_tiles


# ----------------------------- Pallas kernels ------------------------------

def _make_kernels(H, W, TN, S, LP):
    """Kernels closed over the static geometry (image size, images/tile, slab layout)."""
    HW = H * W

    def _edge_masks():
        # Valid-lane masks for the w-1 / w+1 taps (pixels are flat, row-major, no W pad).
        col = jax.lax.broadcasted_iota(jnp.int32, (1, HW), 1) % W
        return col != 0, col != (W - 1)

    def _build_patches_t(x_ref, pt_ref, n_local, mask_l, mask_r):
        """patches^T [KPAD, H*W] for image n_local; rows ordered (kh, kw, cin)."""
        base = n_local * S + LP + W          # flat index of output pixel (0,0)'s center
        for dh in (-1, 0, 1):
            for dw in (-1, 0, 1):
                row0 = ((dh + 1) * 3 + (dw + 1)) * CIN
                start = base + dh * W + dw
                tap = x_ref[:, start:start + HW]              # [CIN, HW] (all channels)
                if dw == -1:
                    tap = jnp.where(mask_l, tap, 0.0)
                elif dw == 1:
                    tap = jnp.where(mask_r, tap, 0.0)
                pt_ref[row0:row0 + CIN, :] = tap

    def stats_kernel(x_ref, w_ref, stat_ref, pt_ref):
        """Pass 1: per-tile partial sum(y) / sum(y^2), y = conv output (channels major)."""
        mask_l, mask_r = _edge_masks()
        pt_ref[NTAPS:KPAD, :] = jnp.zeros((KPAD - NTAPS, HW), jnp.float32)
        s1 = jnp.zeros((COUT, 1), jnp.float32)
        s2 = jnp.zeros((COUT, 1), jnp.float32)
        for n_local in range(TN):
            _build_patches_t(x_ref, pt_ref, n_local, mask_l, mask_r)
            y = jnp.dot(w_ref[...], pt_ref[...],
                        preferred_element_type=jnp.float32)   # [COUT, HW]
            s1 = s1 + jnp.sum(y, axis=1, keepdims=True)
            s2 = s2 + jnp.sum(y * y, axis=1, keepdims=True)
        stat_ref[0] = jnp.concatenate([s1, s2], axis=1)       # [COUT, 2]

    def norm_kernel(x_ref, w_ref, scale_ref, shift_ref, o_ref, pt_ref):
        """Pass 2: recompute y; fused BN affine + ReLU; write y^T = NCHW directly."""
        mask_l, mask_r = _edge_masks()
        pt_ref[NTAPS:KPAD, :] = jnp.zeros((KPAD - NTAPS, HW), jnp.float32)
        for n_local in range(TN):
            _build_patches_t(x_ref, pt_ref, n_local, mask_l, mask_r)
            y = jnp.dot(w_ref[...], pt_ref[...],
                        preferred_element_type=jnp.float32)   # [COUT, HW]
            o_ref[n_local] = jnp.maximum(y * scale_ref[...] + shift_ref[...], 0.0)

    return stats_kernel, norm_kernel


# ------------------------------ host wrapper -------------------------------

@functools.partial(jax.jit, static_argnames=("tile_px",))
def input_layer_forward(x_nchw, w_hwio, gamma, beta, tile_px=DEFAULT_TILE_PX):
    """Forward pass of InputLayer.

    x_nchw : [N, 3, H, W]  float32
    w_hwio : [3, 3, 3, 64] conv weight (HWIO)
    gamma  : [64]          BN weight
    beta   : [64]          BN bias
    returns: [N, 64, H, W] float32
    """
    N, Cin, H, W = x_nchw.shape
    assert Cin == CIN
    Cout = w_hwio.shape[-1]
    HW = H * W
    M = N * HW
    Hp = H + 2

    # Host prep: per-channel plane slabs with the pixel axis flat on the last dim.
    # Per image: [LP zeros | Hp*W H-padded plane | trailing zeros], slab length S a
    # multiple of 128 with >= W+1 guard zeros on both sides so every static tap slice
    # inside the kernel stays in bounds.
    LP = _round_up(W + 1, 8)
    S = _round_up(LP + Hp * W + W + 1, 128)

    tn, num_tiles = _pick_tiling(N, HW, tile_px)
    n_pad = num_tiles * tn                                     # zero images contribute 0

    xp = jnp.pad(jnp.transpose(x_nchw, (1, 0, 2, 3)).astype(jnp.float32),
                 ((0, 0), (0, 0), (1, 1), (0, 0)))             # [Cin, N, Hp, W]
    ximg = jnp.pad(xp.reshape(CIN, N, Hp * W),
                   ((0, 0), (0, n_pad - N), (LP, S - LP - Hp * W)))
    xflat = ximg.reshape(CIN, n_pad * S)                       # [3, n_pad*S]

    # Conv weight, transposed + K padded 27 -> 32: y^T = w_t @ patches^T.
    w_t = jnp.pad(w_hwio.reshape(NTAPS, Cout).astype(jnp.float32).T,
                  ((0, 0), (0, KPAD - NTAPS)))                 # [64, 32]

    stats_kernel, norm_kernel = _make_kernels(H, W, tn, S, LP)

    x_spec = pl.BlockSpec((CIN, tn * S), lambda i: (0, i))     # streamed input tile
    w_spec = pl.BlockSpec((Cout, KPAD), lambda i: (0, 0))      # resident weight

    # ---------------- pass 1: per-tile partial BN statistics ----------------
    stats = pl.pallas_call(
        stats_kernel,
        out_shape=jax.ShapeDtypeStruct((num_tiles, Cout, 2), jnp.float32),
        grid_spec=pltpu.PrefetchScalarGridSpec(
            num_scalar_prefetch=0,
            grid=(num_tiles,),
            in_specs=[x_spec, w_spec],
            out_specs=pl.BlockSpec((1, Cout, 2), lambda i: (i, 0, 0)),
            scratch_shapes=[pltpu.VMEM((KPAD, HW), jnp.float32)],
        ),
        compiler_params=pltpu.CompilerParams(
            dimension_semantics=("parallel",),
            vmem_limit_bytes=VMEM_LIMIT,
        ),
        cost_estimate=pl.CostEstimate(
            flops=2 * n_pad * HW * KPAD * Cout,
            transcendentals=0,
            bytes_accessed=4 * (CIN * n_pad * S + Cout * KPAD + num_tiles * Cout * 2),
        ),
    )(xflat, w_t)

    # Combine per-tile partials (tiny XLA reduction); divide by the TRUE pixel count
    # (padded zero images contribute nothing to the sums).
    sums = jnp.sum(stats, axis=0)                              # [64, 2]
    mean = sums[:, 0] / M
    var = jnp.maximum(sums[:, 1] / M - mean * mean, 0.0)       # biased variance
    scale = gamma.astype(jnp.float32) * jax.lax.rsqrt(var + EPS)
    shift = beta.astype(jnp.float32) - mean * scale
    scale = scale.reshape(Cout, 1)
    shift = shift.reshape(Cout, 1)

    # -------- pass 2: recompute conv + fused BN affine + ReLU, NCHW output --------
    out3 = pl.pallas_call(
        norm_kernel,
        out_shape=jax.ShapeDtypeStruct((n_pad, Cout, HW), jnp.float32),
        grid_spec=pltpu.PrefetchScalarGridSpec(
            num_scalar_prefetch=0,
            grid=(num_tiles,),
            in_specs=[
                x_spec,
                w_spec,
                pl.BlockSpec((Cout, 1), lambda i: (0, 0)),     # BN scale (resident)
                pl.BlockSpec((Cout, 1), lambda i: (0, 0)),     # BN shift (resident)
            ],
            out_specs=pl.BlockSpec((tn, Cout, HW), lambda i: (i, 0, 0)),
            scratch_shapes=[pltpu.VMEM((KPAD, HW), jnp.float32)],
        ),
        compiler_params=pltpu.CompilerParams(
            dimension_semantics=("parallel",),
            vmem_limit_bytes=VMEM_LIMIT,
        ),
        cost_estimate=pl.CostEstimate(
            flops=2 * n_pad * HW * KPAD * Cout + 3 * n_pad * HW * Cout,
            transcendentals=0,
            bytes_accessed=4 * (CIN * n_pad * S + Cout * (KPAD + 2) + n_pad * Cout * HW),
        ),
    )(xflat, w_t, scale, shift)

    # Already channel-major per image: just drop batch padding and reshape (free).
    return out3[:N].reshape(N, Cout, H, W)


# ------------------------------- reference ---------------------------------

def _reference_forward(x_nchw, w_hwio, gamma, beta):
    """Pure-JAX reference (conv + batch-stat BN + ReLU)."""
    x_nhwc = jnp.transpose(x_nchw, (0, 2, 3, 1))
    y = jax.lax.conv_general_dilated(
        x_nhwc, w_hwio, window_strides=(1, 1), padding="SAME",
        dimension_numbers=("NHWC", "HWIO", "NHWC"))
    mean = jnp.mean(y, axis=(0, 1, 2), keepdims=True)
    var = jnp.mean((y - mean) ** 2, axis=(0, 1, 2), keepdims=True)  # biased var
    y_hat = (y - mean) * jax.lax.rsqrt(var + EPS) * gamma + beta
    return jnp.transpose(jnp.maximum(y_hat, 0.0), (0, 3, 1, 2))


if __name__ == "__main__":
    key = jax.random.PRNGKey(0)
    kx, kw, kg, kb, kx2 = jax.random.split(key, 5)

    # Small shapes consistent with the module: N=2, Cin=3, H=W=16, Cout=64.
    N, H, W = 2, 16, 16
    x = jax.random.normal(kx, (N, CIN, H, W), dtype=jnp.float32)

    fan_in = CIN * 3 * 3
    w_hwio = jax.random.normal(kw, (3, 3, CIN, COUT), dtype=jnp.float32) * (2.0 / fan_in) ** 0.5
    gamma = 1.0 + 0.1 * jax.random.normal(kg, (COUT,), dtype=jnp.float32)
    beta = 0.1 * jax.random.normal(kb, (COUT,), dtype=jnp.float32)

    ref = jax.block_until_ready(_reference_forward(x, w_hwio, gamma, beta))
    out = jax.block_until_ready(input_layer_forward(x, w_hwio, gamma, beta))
    assert out.shape == (N, COUT, H, W), out.shape
    assert jnp.allclose(out, ref, rtol=1e-4, atol=1e-4), "mismatch vs reference (N=2)"

    # Odd batch -> exercises batch padding with a zero image and the 2-tile
    # (v7x 2-TensorCore friendly) global-BN-statistics path.
    x3 = jax.random.normal(kx2, (3, CIN, H, W), dtype=jnp.float32)
    ref3 = jax.block_until_ready(_reference_forward(x3, w_hwio, gamma, beta))
    out3 = jax.block_until_ready(input_layer_forward(x3, w_hwio, gamma, beta))
    assert jnp.allclose(out3, ref3, rtol=1e-4, atol=1e-4), "mismatch vs reference (N=3)"

    print("KERNEL_OK")
</pallas_src>

<mosaic_0001>
module attributes {stable_mosaic.version = 11 : i64} {
  func.func @stats_kernel(%arg0: i32, %arg1: memref<3x384xf32, #tpu.memory_space<vmem>>, %arg2: memref<64x32xf32, #tpu.memory_space<vmem>>, %arg3: memref<1x64x2xf32, #tpu.memory_space<vmem>>, %arg4: memref<32x256xf32, #tpu.memory_space<vmem>>) attributes {dimension_semantics = [#tpu.dimension_semantics<parallel>], iteration_bounds = array<i64: 2>, scalar_prefetch = 0 : i64, scratch_operands = 1 : i64, tpu.core_type = #tpu.core_type<tc>, window_params = [{transform_indices = @transform_0, window_bounds = array<i64: 3, 384>}, {pipeline_mode = #tpu.pipeline_mode<synchronous>, transform_indices = @transform_1, window_bounds = array<i64: 64, 32>}, {transform_indices = @transform_2, window_bounds = array<i64: 1, 64, 2>}]} {
    %0 = tpu.iota {dimensions = array<i32: 1>} : vector<1x256xi32>
    %c16_i32 = arith.constant 16 : i32
    %c0_i32 = arith.constant 0 : i32
    %1 = arith.cmpi eq, %c16_i32, %c0_i32 : i32
    %c1_i32 = arith.constant 1 : i32
    %2 = arith.select %1, %c1_i32, %c16_i32 : i32
    %3 = vector.broadcast %2 : i32 to vector<1x256xi32>
    %4 = arith.remsi %0, %3 : vector<1x256xi32>
    %c0_i32_0 = arith.constant 0 : i32
    %5 = vector.broadcast %c0_i32_0 : i32 to vector<1x256xi32>
    %6 = arith.cmpi ne, %4, %5 : vector<1x256xi32>
    %c0_i32_1 = arith.constant 0 : i32
    %7 = vector.broadcast %c0_i32_1 : i32 to vector<1x256xi32>
    %8 = arith.cmpi slt, %4, %7 : vector<1x256xi32>
    %c0_i32_2 = arith.constant 0 : i32
    %9 = arith.cmpi slt, %2, %c0_i32_2 : i32
    %10 = vector.broadcast %9 : i1 to vector<1x256xi1>
    %11 = vector.broadcast %10 : vector<1x256xi1> to vector<1x256xi1>
    %12 = arith.xori %8, %11 : vector<1x256xi1>
    %13 = arith.andi %12, %6 : vector<1x256xi1>
    %14 = vector.broadcast %2 : i32 to vector<1x256xi32>
    %15 = arith.addi %4, %14 : vector<1x256xi32>
    %16 = arith.select %13, %15, %4 : vector<1x256xi1>, vector<1x256xi32>
    %c0_i32_3 = arith.constant 0 : i32
    %17 = vector.broadcast %c0_i32_3 : i32 to vector<1x256xi32>
    %18 = arith.cmpi ne, %16, %17 : vector<1x256xi32>
    %c15_i32 = arith.constant 15 : i32
    %19 = vector.broadcast %c15_i32 : i32 to vector<1x256xi32>
    %20 = arith.cmpi ne, %16, %19 : vector<1x256xi32>
    %cst = arith.constant 0.000000e+00 : f32
    %21 = vector.broadcast %cst : f32 to vector<5x256xf32>
    %c27 = arith.constant 27 : index
    %c0 = arith.constant 0 : index
    %22 = vector.load %arg4[%c27, %c0] : memref<32x256xf32, #tpu.memory_space<vmem>>, vector<5x256xf32>
    tpu.vector_store %arg4[%c27, %c0], %21 {strides = array<i32>} : memref<32x256xf32, #tpu.memory_space<vmem>>, vector<5x256xf32>,
    %cst_4 = arith.constant 0.000000e+00 : f32
    %23 = vector.broadcast %cst_4 : f32 to vector<64x1xf32>
    %cst_5 = arith.constant 0.000000e+00 : f32
    %24 = vector.broadcast %cst_5 : f32 to vector<64x1xf32>
    %c0_6 = arith.constant 0 : index
    %c23 = arith.constant 23 : index
    %25 = vector.load %arg1[%c0_6, %c23] : memref<3x384xf32, #tpu.memory_space<vmem>>, vector<3x256xf32>
    %cst_7 = arith.constant 0.000000e+00 : f32
    %26 = vector.shape_cast %18 : vector<1x256xi1> to vector<1x256xi1>
    %27 = vector.broadcast %26 : vector<1x256xi1> to vector<3x256xi1>
    %28 = vector.broadcast %cst_7 : f32 to vector<3x256xf32>
    %29 = arith.select %27, %25, %28 : vector<3x256xi1>, vector<3x256xf32>
    %c0_8 = arith.constant 0 : index
    %c0_9 = arith.constant 0 : index
    %30 = vector.load %arg4[%c0_8, %c0_9] : memref<32x256xf32, #tpu.memory_space<vmem>>, vector<3x256xf32>
    tpu.vector_store %arg4[%c0_8, %c0_9], %29 {strides = array<i32>} : memref<32x256xf32, #tpu.memory_space<vmem>>, vector<3x256xf32>,
    %c0_10 = arith.constant 0 : index
    %c24 = arith.constant 24 : index
    %31 = vector.load %arg1[%c0_10, %c24] : memref<3x384xf32, #tpu.memory_space<vmem>>, vector<3x256xf32>
    %c3 = arith.constant 3 : index
    %c0_11 = arith.constant 0 : index
    %32 = vector.load %arg4[%c3, %c0_11] : memref<32x256xf32, #tpu.memory_space<vmem>>, vector<3x256xf32>
    tpu.vector_store %arg4[%c3, %c0_11], %31 {strides = array<i32>} : memref<32x256xf32, #tpu.memory_space<vmem>>, vector<3x256xf32>,
    %c0_12 = arith.constant 0 : index
    %c25 = arith.constant 25 : index
    %33 = vector.load %arg1[%c0_12, %c25] : memref<3x384xf32, #tpu.memory_space<vmem>>, vector<3x256xf32>
    %cst_13 = arith.constant 0.000000e+00 : f32
    %34 = vector.shape_cast %20 : vector<1x256xi1> to vector<1x256xi1>
    %35 = vector.broadcast %34 : vector<1x256xi1> to vector<3x256xi1>
    %36 = vector.broadcast %cst_13 : f32 to vector<3x256xf32>
    %37 = arith.select %35, %33, %36 : vector<3x256xi1>, vector<3x256xf32>
    %c6 = arith.constant 6 : index
    %c0_14 = arith.constant 0 : index
    %38 = vector.load %arg4[%c6, %c0_14] : memref<32x256xf32, #tpu.memory_space<vmem>>, vector<3x256xf32>
    tpu.vector_store %arg4[%c6, %c0_14], %37 {strides = array<i32>} : memref<32x256xf32, #tpu.memory_space<vmem>>, vector<3x256xf32>,
    %c0_15 = arith.constant 0 : index
    %c39 = arith.constant 39 : index
    %39 = vector.load %arg1[%c0_15, %c39] : memref<3x384xf32, #tpu.memory_space<vmem>>, vector<3x256xf32>
    %cst_16 = arith.constant 0.000000e+00 : f32
    %40 = vector.shape_cast %18 : vector<1x256xi1> to vector<1x256xi1>
    %41 = vector.broadcast %40 : vector<1x256xi1> to vector<3x256xi1>
    %42 = vector.broadcast %cst_16 : f32 to vector<3x256xf32>
    %43 = arith.select %41, %39, %42 : vector<3x256xi1>, vector<3x256xf32>
    %c9 = arith.constant 9 : index
    %c0_17 = arith.constant 0 : index
    %44 = vector.load %arg4[%c9, %c0_17] : memref<32x256xf32, #tpu.memory_space<vmem>>, vector<3x256xf32>
    tpu.vector_store %arg4[%c9, %c0_17], %43 {strides = array<i32>} : memref<32x256xf32, #tpu.memory_space<vmem>>, vector<3x256xf32>,
    %c0_18 = arith.constant 0 : index
    %c40 = arith.constant 40 : index
    %45 = vector.load %arg1[%c0_18, %c40] : memref<3x384xf32, #tpu.memory_space<vmem>>, vector<3x256xf32>
    %c12 = arith.constant 12 : index
    %c0_19 = arith.constant 0 : index
    %46 = vector.load %arg4[%c12, %c0_19] : memref<32x256xf32, #tpu.memory_space<vmem>>, vector<3x256xf32>
    tpu.vector_store %arg4[%c12, %c0_19], %45 {strides = array<i32>} : memref<32x256xf32, #tpu.memory_space<vmem>>, vector<3x256xf32>,
    %c0_20 = arith.constant 0 : index
    %c41 = arith.constant 41 : index
    %47 = vector.load %arg1[%c0_20, %c41] : memref<3x384xf32, #tpu.memory_space<vmem>>, vector<3x256xf32>
    %cst_21 = arith.constant 0.000000e+00 : f32
    %48 = vector.shape_cast %20 : vector<1x256xi1> to vector<1x256xi1>
    %49 = vector.broadcast %48 : vector<1x256xi1> to vector<3x256xi1>
    %50 = vector.broadcast %cst_21 : f32 to vector<3x256xf32>
    %51 = arith.select %49, %47, %50 : vector<3x256xi1>, vector<3x256xf32>
    %c15 = arith.constant 15 : index
    %c0_22 = arith.constant 0 : index
    %52 = vector.load %arg4[%c15, %c0_22] : memref<32x256xf32, #tpu.memory_space<vmem>>, vector<3x256xf32>
    tpu.vector_store %arg4[%c15, %c0_22], %51 {strides = array<i32>} : memref<32x256xf32, #tpu.memory_space<vmem>>, vector<3x256xf32>,
    %c0_23 = arith.constant 0 : index
    %c55 = arith.constant 55 : index
    %53 = vector.load %arg1[%c0_23, %c55] : memref<3x384xf32, #tpu.memory_space<vmem>>, vector<3x256xf32>
    %cst_24 = arith.constant 0.000000e+00 : f32
    %54 = vector.shape_cast %18 : vector<1x256xi1> to vector<1x256xi1>
    %55 = vector.broadcast %54 : vector<1x256xi1> to vector<3x256xi1>
    %56 = vector.broadcast %cst_24 : f32 to vector<3x256xf32>
    %57 = arith.select %55, %53, %56 : vector<3x256xi1>, vector<3x256xf32>
    %c18 = arith.constant 18 : index
    %c0_25 = arith.constant 0 : index
    %58 = vector.load %arg4[%c18, %c0_25] : memref<32x256xf32, #tpu.memory_space<vmem>>, vector<3x256xf32>
    tpu.vector_store %arg4[%c18, %c0_25], %57 {strides = array<i32>} : memref<32x256xf32, #tpu.memory_space<vmem>>, vector<3x256xf32>,
    %c0_26 = arith.constant 0 : index
    %c56 = arith.constant 56 : index
    %59 = vector.load %arg1[%c0_26, %c56] : memref<3x384xf32, #tpu.memory_space<vmem>>, vector<3x256xf32>
    %c21 = arith.constant 21 : index
    %c0_27 = arith.constant 0 : index
    %60 = vector.load %arg4[%c21, %c0_27] : memref<32x256xf32, #tpu.memory_space<vmem>>, vector<3x256xf32>
    tpu.vector_store %arg4[%c21, %c0_27], %59 {strides = array<i32>} : memref<32x256xf32, #tpu.memory_space<vmem>>, vector<3x256xf32>,
    %c0_28 = arith.constant 0 : index
    %c57 = arith.constant 57 : index
    %61 = vector.load %arg1[%c0_28, %c57] : memref<3x384xf32, #tpu.memory_space<vmem>>, vector<3x256xf32>
    %cst_29 = arith.constant 0.000000e+00 : f32
    %62 = vector.shape_cast %20 : vector<1x256xi1> to vector<1x256xi1>
    %63 = vector.broadcast %62 : vector<1x256xi1> to vector<3x256xi1>
    %64 = vector.broadcast %cst_29 : f32 to vector<3x256xf32>
    %65 = arith.select %63, %61, %64 : vector<3x256xi1>, vector<3x256xf32>
    %c24_30 = arith.constant 24 : index
    %c0_31 = arith.constant 0 : index
    %66 = vector.load %arg4[%c24_30, %c0_31] : memref<32x256xf32, #tpu.memory_space<vmem>>, vector<3x256xf32>
    tpu.vector_store %arg4[%c24_30, %c0_31], %65 {strides = array<i32>} : memref<32x256xf32, #tpu.memory_space<vmem>>, vector<3x256xf32>,
    %c0_32 = arith.constant 0 : index
    %c0_33 = arith.constant 0 : index
    %67 = vector.load %arg2[%c0_32, %c0_33] : memref<64x32xf32, #tpu.memory_space<vmem>>, vector<64x32xf32>
    %c0_34 = arith.constant 0 : index
    %c0_35 = arith.constant 0 : index
    %68 = vector.load %arg4[%c0_34, %c0_35] : memref<32x256xf32, #tpu.memory_space<vmem>>, vector<32x256xf32>
    %cst_36 = arith.constant dense<0.000000e+00> : vector<64x256xf32>
    %69 = tpu.matmul %67, %68, %cst_36 {dimension_numbers = #tpu.dot_dimension_numbers<[1], [0], [0], [1], [0, 0, 1, 1], [], []>} : vector<64x32xf32>, vector<32x256xf32>, vector<64x256xf32> -> vector<64x256xf32>
    %cst_37 = arith.constant dense<0.000000e+00> : vector<64xf32>
    %70 = vector.multi_reduction <add>, %69, %cst_37 [1] : vector<64x256xf32> to vector<64xf32>
    %71 = vector.shape_cast %70 : vector<64xf32> to vector<64x1xf32>
    %72 = arith.addf %23, %71 : vector<64x1xf32>
    %73 = arith.mulf %69, %69 : vector<64x256xf32>
    %cst_38 = arith.constant dense<0.000000e+00> : vector<64xf32>
    %74 = vector.multi_reduction <add>, %73, %cst_38 [1] : vector<64x256xf32> to vector<64xf32>
    %75 = vector.shape_cast %74 : vector<64xf32> to vector<64x1xf32>
    %76 = arith.addf %24, %75 : vector<64x1xf32>
    %77 = tpu.concatenate %72, %76 in 1 : vector<64x1xf32>, vector<64x1xf32> -> vector<64x2xf32>
    %c0_39 = arith.constant 0 : index
    %c0_40 = arith.constant 0 : index
    %c0_41 = arith.constant 0 : index
    %78 = vector.load %arg3[%c0_39, %c0_40, %c0_41] : memref<1x64x2xf32, #tpu.memory_space<vmem>>, vector<1x64x2xf32>
    %79 = vector.shape_cast %78 : vector<1x64x2xf32> to vector<64x2xf32>
    %80 = vector.shape_cast %77 : vector<64x2xf32> to vector<1x64x2xf32>
    tpu.vector_store %arg3[%c0_39, %c0_40, %c0_41], %80 {strides = array<i32>} : memref<1x64x2xf32, #tpu.memory_space<vmem>>, vector<1x64x2xf32>,
    return
  }
  func.func @transform_0(%arg0: i32) -> (i32, i32) {
    %c0_i32 = arith.constant 0 : i32
    %c0_i32_0 = arith.constant 0 : i32
    return %c0_i32, %arg0 : i32, i32
  }
  func.func @transform_1(%arg0: i32) -> (i32, i32) {
    %c0_i32 = arith.constant 0 : i32
    %c0_i32_0 = arith.constant 0 : i32
    %c0_i32_1 = arith.constant 0 : i32
    return %c0_i32, %c0_i32_0 : i32, i32
  }
  func.func @transform_2(%arg0: i32) -> (i32, i32, i32) {
    %c0_i32 = arith.constant 0 : i32
    %c0_i32_0 = arith.constant 0 : i32
    %c0_i32_1 = arith.constant 0 : i32
    return %arg0, %c0_i32, %c0_i32_0 : i32, i32, i32
  }
}

module attributes {stable_mosaic.version = 11 : i64} {
  func.func @norm_kernel(%arg0: i32, %arg1: memref<3x384xf32, #tpu.memory_space<vmem>>, %arg2: memref<64x32xf32, #tpu.memory_space<vmem>>, %arg3: memref<64x1xf32, #tpu.memory_space<vmem>>, %arg4: memref<64x1xf32, #tpu.memory_space<vmem>>, %arg5: memref<1x64x256xf32, #tpu.memory_space<vmem>>, %arg6: memref<32x256xf32, #tpu.memory_space<vmem>>) attributes {dimension_semantics = [#tpu.dimension_semantics<parallel>], iteration_bounds = array<i64: 2>, scalar_prefetch = 0 : i64, scratch_operands = 1 : i64, tpu.core_type = #tpu.core_type<tc>, window_params = [{transform_indices = @transform_0, window_bounds = array<i64: 3, 384>}, {pipeline_mode = #tpu.pipeline_mode<synchronous>, transform_indices = @transform_1, window_bounds = array<i64: 64, 32>}, {pipeline_mode = #tpu.pipeline_mode<synchronous>, transform_indices = @transform_2, window_bounds = array<i64: 64, 1>}, {pipeline_mode = #tpu.pipeline_mode<synchronous>, transform_indices = @transform_3, window_bounds = array<i64: 64, 1>}, {transform_indices = @transform_4, window_bounds = array<i64: 1, 64, 256>}]} {
    %0 = tpu.iota {dimensions = array<i32: 1>} : vector<1x256xi32>
    %c16_i32 = arith.constant 16 : i32
    %c0_i32 = arith.constant 0 : i32
    %1 = arith.cmpi eq, %c16_i32, %c0_i32 : i32
    %c1_i32 = arith.constant 1 : i32
    %2 = arith.select %1, %c1_i32, %c16_i32 : i32
    %3 = vector.broadcast %2 : i32 to vector<1x256xi32>
    %4 = arith.remsi %0, %3 : vector<1x256xi32>
    %c0_i32_0 = arith.constant 0 : i32
    %5 = vector.broadcast %c0_i32_0 : i32 to vector<1x256xi32>
    %6 = arith.cmpi ne, %4, %5 : vector<1x256xi32>
    %c0_i32_1 = arith.constant 0 : i32
    %7 = vector.broadcast %c0_i32_1 : i32 to vector<1x256xi32>
    %8 = arith.cmpi slt, %4, %7 : vector<1x256xi32>
    %c0_i32_2 = arith.constant 0 : i32
    %9 = arith.cmpi slt, %2, %c0_i32_2 : i32
    %10 = vector.broadcast %9 : i1 to vector<1x256xi1>
    %11 = vector.broadcast %10 : vector<1x256xi1> to vector<1x256xi1>
    %12 = arith.xori %8, %11 : vector<1x256xi1>
    %13 = arith.andi %12, %6 : vector<1x256xi1>
    %14 = vector.broadcast %2 : i32 to vector<1x256xi32>
    %15 = arith.addi %4, %14 : vector<1x256xi32>
    %16 = arith.select %13, %15, %4 : vector<1x256xi1>, vector<1x256xi32>
    %c0_i32_3 = arith.constant 0 : i32
    %17 = vector.broadcast %c0_i32_3 : i32 to vector<1x256xi32>
    %18 = arith.cmpi ne, %16, %17 : vector<1x256xi32>
    %c15_i32 = arith.constant 15 : i32
    %19 = vector.broadcast %c15_i32 : i32 to vector<1x256xi32>
    %20 = arith.cmpi ne, %16, %19 : vector<1x256xi32>
    %cst = arith.constant 0.000000e+00 : f32
    %21 = vector.broadcast %cst : f32 to vector<5x256xf32>
    %c27 = arith.constant 27 : index
    %c0 = arith.constant 0 : index
    %22 = vector.load %arg6[%c27, %c0] : memref<32x256xf32, #tpu.memory_space<vmem>>, vector<5x256xf32>
    tpu.vector_store %arg6[%c27, %c0], %21 {strides = array<i32>} : memref<32x256xf32, #tpu.memory_space<vmem>>, vector<5x256xf32>,
    %c0_4 = arith.constant 0 : index
    %c23 = arith.constant 23 : index
    %23 = vector.load %arg1[%c0_4, %c23] : memref<3x384xf32, #tpu.memory_space<vmem>>, vector<3x256xf32>
    %cst_5 = arith.constant 0.000000e+00 : f32
    %24 = vector.shape_cast %18 : vector<1x256xi1> to vector<1x256xi1>
    %25 = vector.broadcast %24 : vector<1x256xi1> to vector<3x256xi1>
    %26 = vector.broadcast %cst_5 : f32 to vector<3x256xf32>
    %27 = arith.select %25, %23, %26 : vector<3x256xi1>, vector<3x256xf32>
    %c0_6 = arith.constant 0 : index
    %c0_7 = arith.constant 0 : index
    %28 = vector.load %arg6[%c0_6, %c0_7] : memref<32x256xf32, #tpu.memory_space<vmem>>, vector<3x256xf32>
    tpu.vector_store %arg6[%c0_6, %c0_7], %27 {strides = array<i32>} : memref<32x256xf32, #tpu.memory_space<vmem>>, vector<3x256xf32>,
    %c0_8 = arith.constant 0 : index
    %c24 = arith.constant 24 : index
    %29 = vector.load %arg1[%c0_8, %c24] : memref<3x384xf32, #tpu.memory_space<vmem>>, vector<3x256xf32>
    %c3 = arith.constant 3 : index
    %c0_9 = arith.constant 0 : index
    %30 = vector.load %arg6[%c3, %c0_9] : memref<32x256xf32, #tpu.memory_space<vmem>>, vector<3x256xf32>
    tpu.vector_store %arg6[%c3, %c0_9], %29 {strides = array<i32>} : memref<32x256xf32, #tpu.memory_space<vmem>>, vector<3x256xf32>,
    %c0_10 = arith.constant 0 : index
    %c25 = arith.constant 25 : index
    %31 = vector.load %arg1[%c0_10, %c25] : memref<3x384xf32, #tpu.memory_space<vmem>>, vector<3x256xf32>
    %cst_11 = arith.constant 0.000000e+00 : f32
    %32 = vector.shape_cast %20 : vector<1x256xi1> to vector<1x256xi1>
    %33 = vector.broadcast %32 : vector<1x256xi1> to vector<3x256xi1>
    %34 = vector.broadcast %cst_11 : f32 to vector<3x256xf32>
    %35 = arith.select %33, %31, %34 : vector<3x256xi1>, vector<3x256xf32>
    %c6 = arith.constant 6 : index
    %c0_12 = arith.constant 0 : index
    %36 = vector.load %arg6[%c6, %c0_12] : memref<32x256xf32, #tpu.memory_space<vmem>>, vector<3x256xf32>
    tpu.vector_store %arg6[%c6, %c0_12], %35 {strides = array<i32>} : memref<32x256xf32, #tpu.memory_space<vmem>>, vector<3x256xf32>,
    %c0_13 = arith.constant 0 : index
    %c39 = arith.constant 39 : index
    %37 = vector.load %arg1[%c0_13, %c39] : memref<3x384xf32, #tpu.memory_space<vmem>>, vector<3x256xf32>
    %cst_14 = arith.constant 0.000000e+00 : f32
    %38 = vector.shape_cast %18 : vector<1x256xi1> to vector<1x256xi1>
    %39 = vector.broadcast %38 : vector<1x256xi1> to vector<3x256xi1>
    %40 = vector.broadcast %cst_14 : f32 to vector<3x256xf32>
    %41 = arith.select %39, %37, %40 : vector<3x256xi1>, vector<3x256xf32>
    %c9 = arith.constant 9 : index
    %c0_15 = arith.constant 0 : index
    %42 = vector.load %arg6[%c9, %c0_15] : memref<32x256xf32, #tpu.memory_space<vmem>>, vector<3x256xf32>
    tpu.vector_store %arg6[%c9, %c0_15], %41 {strides = array<i32>} : memref<32x256xf32, #tpu.memory_space<vmem>>, vector<3x256xf32>,
    %c0_16 = arith.constant 0 : index
    %c40 = arith.constant 40 : index
    %43 = vector.load %arg1[%c0_16, %c40] : memref<3x384xf32, #tpu.memory_space<vmem>>, vector<3x256xf32>
    %c12 = arith.constant 12 : index
    %c0_17 = arith.constant 0 : index
    %44 = vector.load %arg6[%c12, %c0_17] : memref<32x256xf32, #tpu.memory_space<vmem>>, vector<3x256xf32>
    tpu.vector_store %arg6[%c12, %c0_17], %43 {strides = array<i32>} : memref<32x256xf32, #tpu.memory_space<vmem>>, vector<3x256xf32>,
    %c0_18 = arith.constant 0 : index
    %c41 = arith.constant 41 : index
    %45 = vector.load %arg1[%c0_18, %c41] : memref<3x384xf32, #tpu.memory_space<vmem>>, vector<3x256xf32>
    %cst_19 = arith.constant 0.000000e+00 : f32
    %46 = vector.shape_cast %20 : vector<1x256xi1> to vector<1x256xi1>
    %47 = vector.broadcast %46 : vector<1x256xi1> to vector<3x256xi1>
    %48 = vector.broadcast %cst_19 : f32 to vector<3x256xf32>
    %49 = arith.select %47, %45, %48 : vector<3x256xi1>, vector<3x256xf32>
    %c15 = arith.constant 15 : index
    %c0_20 = arith.constant 0 : index
    %50 = vector.load %arg6[%c15, %c0_20] : memref<32x256xf32, #tpu.memory_space<vmem>>, vector<3x256xf32>
    tpu.vector_store %arg6[%c15, %c0_20], %49 {strides = array<i32>} : memref<32x256xf32, #tpu.memory_space<vmem>>, vector<3x256xf32>,
    %c0_21 = arith.constant 0 : index
    %c55 = arith.constant 55 : index
    %51 = vector.load %arg1[%c0_21, %c55] : memref<3x384xf32, #tpu.memory_space<vmem>>, vector<3x256xf32>
    %cst_22 = arith.constant 0.000000e+00 : f32
    %52 = vector.shape_cast %18 : vector<1x256xi1> to vector<1x256xi1>
    %53 = vector.broadcast %52 : vector<1x256xi1> to vector<3x256xi1>
    %54 = vector.broadcast %cst_22 : f32 to vector<3x256xf32>
    %55 = arith.select %53, %51, %54 : vector<3x256xi1>, vector<3x256xf32>
    %c18 = arith.constant 18 : index
    %c0_23 = arith.constant 0 : index
    %56 = vector.load %arg6[%c18, %c0_23] : memref<32x256xf32, #tpu.memory_space<vmem>>, vector<3x256xf32>
    tpu.vector_store %arg6[%c18, %c0_23], %55 {strides = array<i32>} : memref<32x256xf32, #tpu.memory_space<vmem>>, vector<3x256xf32>,
    %c0_24 = arith.constant 0 : index
    %c56 = arith.constant 56 : index
    %57 = vector.load %arg1[%c0_24, %c56] : memref<3x384xf32, #tpu.memory_space<vmem>>, vector<3x256xf32>
    %c21 = arith.constant 21 : index
    %c0_25 = arith.constant 0 : index
    %58 = vector.load %arg6[%c21, %c0_25] : memref<32x256xf32, #tpu.memory_space<vmem>>, vector<3x256xf32>
    tpu.vector_store %arg6[%c21, %c0_25], %57 {strides = array<i32>} : memref<32x256xf32, #tpu.memory_space<vmem>>, vector<3x256xf32>,
    %c0_26 = arith.constant 0 : index
    %c57 = arith.constant 57 : index
    %59 = vector.load %arg1[%c0_26, %c57] : memref<3x384xf32, #tpu.memory_space<vmem>>, vector<3x256xf32>
    %cst_27 = arith.constant 0.000000e+00 : f32
    %60 = vector.shape_cast %20 : vector<1x256xi1> to vector<1x256xi1>
    %61 = vector.broadcast %60 : vector<1x256xi1> to vector<3x256xi1>
    %62 = vector.broadcast %cst_27 : f32 to vector<3x256xf32>
    %63 = arith.select %61, %59, %62 : vector<3x256xi1>, vector<3x256xf32>
    %c24_28 = arith.constant 24 : index
    %c0_29 = arith.constant 0 : index
    %64 = vector.load %arg6[%c24_28, %c0_29] : memref<32x256xf32, #tpu.memory_space<vmem>>, vector<3x256xf32>
    tpu.vector_store %arg6[%c24_28, %c0_29], %63 {strides = array<i32>} : memref<32x256xf32, #tpu.memory_space<vmem>>, vector<3x256xf32>,
    %c0_30 = arith.constant 0 : index
    %c0_31 = arith.constant 0 : index
    %65 = vector.load %arg2[%c0_30, %c0_31] : memref<64x32xf32, #tpu.memory_space<vmem>>, vector<64x32xf32>
    %c0_32 = arith.constant 0 : index
    %c0_33 = arith.constant 0 : index
    %66 = vector.load %arg6[%c0_32, %c0_33] : memref<32x256xf32, #tpu.memory_space<vmem>>, vector<32x256xf32>
    %cst_34 = arith.constant dense<0.000000e+00> : vector<64x256xf32>
    %67 = tpu.matmul %65, %66, %cst_34 {dimension_numbers = #tpu.dot_dimension_numbers<[1], [0], [0], [1], [0, 0, 1, 1], [], []>} : vector<64x32xf32>, vector<32x256xf32>, vector<64x256xf32> -> vector<64x256xf32>
    %c0_35 = arith.constant 0 : index
    %c0_36 = arith.constant 0 : index
    %68 = vector.load %arg3[%c0_35, %c0_36] : memref<64x1xf32, #tpu.memory_space<vmem>>, vector<64x1xf32>
    %69 = vector.broadcast %68 : vector<64x1xf32> to vector<64x256xf32>
    %70 = arith.mulf %67, %69 : vector<64x256xf32>
    %c0_37 = arith.constant 0 : index
    %c0_38 = arith.constant 0 : index
    %71 = vector.load %arg4[%c0_37, %c0_38] : memref<64x1xf32, #tpu.memory_space<vmem>>, vector<64x1xf32>
    %72 = vector.broadcast %71 : vector<64x1xf32> to vector<64x256xf32>
    %73 = arith.addf %70, %72 : vector<64x256xf32>
    %cst_39 = arith.constant 0.000000e+00 : f32
    %74 = vector.broadcast %cst_39 : f32 to vector<64x256xf32>
    %75 = arith.maximumf %73, %74 : vector<64x256xf32>
    %c0_40 = arith.constant 0 : index
    %c0_41 = arith.constant 0 : index
    %c0_42 = arith.constant 0 : index
    %76 = vector.load %arg5[%c0_40, %c0_41, %c0_42] : memref<1x64x256xf32, #tpu.memory_space<vmem>>, vector<1x64x256xf32>
    %77 = vector.shape_cast %76 : vector<1x64x256xf32> to vector<64x256xf32>
    %78 = vector.shape_cast %75 : vector<64x256xf32> to vector<1x64x256xf32>
    tpu.vector_store %arg5[%c0_40, %c0_41, %c0_42], %78 {strides = array<i32>} : memref<1x64x256xf32, #tpu.memory_space<vmem>>, vector<1x64x256xf32>,
    return
  }
  func.func @transform_0(%arg0: i32) -> (i32, i32) {
    %c0_i32 = arith.constant 0 : i32
    %c0_i32_0 = arith.constant 0 : i32
    return %c0_i32, %arg0 : i32, i32
  }
  func.func @transform_1(%arg0: i32) -> (i32, i32) {
    %c0_i32 = arith.constant 0 : i32
    %c0_i32_0 = arith.constant 0 : i32
    %c0_i32_1 = arith.constant 0 : i32
    return %c0_i32, %c0_i32_0 : i32, i32
  }
  func.func @transform_2(%arg0: i32) -> (i32, i32) {
    %c0_i32 = arith.constant 0 : i32
    %c0_i32_0 = arith.constant 0 : i32
    %c0_i32_1 = arith.constant 0 : i32
    return %c0_i32, %c0_i32_0 : i32, i32
  }
  func.func @transform_3(%arg0: i32) -> (i32, i32) {
    %c0_i32 = arith.constant 0 : i32
    %c0_i32_0 = arith.constant 0 : i32
    %c0_i32_1 = arith.constant 0 : i32
    return %c0_i32, %c0_i32_0 : i32, i32
  }
  func.func @transform_4(%arg0: i32) -> (i32, i32, i32) {
    %c0_i32 = arith.constant 0 : i32
    %c0_i32_0 = arith.constant 0 : i32
    %c0_i32_1 = arith.constant 0 : i32
    return %arg0, %c0_i32, %c0_i32_0 : i32, i32, i32
  }
}

</mosaic_0001>

<llo_original>
// kernel: input_layer_forward.3
$region0: #{input_layer_forward.3}
  #allocation0 [shape = 'u32[]', space=smem, size = 0x4, offset = 0x4, fixed_abs, tag = 'smem constant byte address 0x4 - core index']
  #allocation1 [shape = 'u32[144,128]{1,0:T(1,128)}', space=vmem, size = 0x12000, scoped, tag = 'internal scratch']
  #allocation2 [shape = 'f32[32,256]{1,0:T(8,128)}', space=vmem, size = 0x8000, scoped, tag = 'scratch operand']
  %s0 = inlined_call_operand.vmem [shape: f32[3,768], index: 0, kind: input, shape index: {}]
  %s1 = inlined_call_operand.vmem [shape: f32[64,32], index: 1, kind: input, shape index: {}]
  %s2 = inlined_call_operand.vmem [shape: f32[64,1], index: 2, kind: input, shape index: {}]
  %s3 = inlined_call_operand.vmem [shape: f32[64,1], index: 3, kind: input, shape index: {}]
  %s4 = inlined_call_operand.vmem [shape: f32[2,64,256], index: 4, kind: output, shape index: {}]
  %s5 = sld [smem:[#allocation0]]
  $region49: #{input_layer_forward.3} parent=0
    _
  %s7 = ssub.s32 1, %s5
  %s8 = scalar_select 0, %s7, %s5
  loop: start=0, step=1, limit=4
  $region2: #{input_layer_forward.3} parent=0 // loop_pre_header
    _
  $region3: #{input_layer_forward.3} parent=0 // loop_header
    %s10 = sphi 0, %s14
    %p11 = scmp.ge.s32.totalorder %s10, 4
    %s20 = sphi 0, %s22
    %s23 = sphi 0, %s20
    %s24 = sphi 0, %s23
    %s40 = sphi 0, %s24
    %s44 = sphi 0, %s44
    %s46 = sphi 0, %s44
    %s47 = sphi 0, %s46
    %s61 = sphi 0, %s47
    %s65 = sphi 0, %s65
    %s67 = sphi 0, %s65
    %s68 = sphi 0, %s67
    %s82 = sphi 0, %s68
    %s86 = sphi 0, %s86
    %s88 = sphi 0, %s86
    %s89 = sphi 0, %s88
    %s103 = sphi 0, %s89
    %s109 = sphi 0, %s111
    %s112 = sphi 0, %s109
    %s113 = sphi 0, %s112
    %s129 = sphi 0, %s113
  $region4: #{input_layer_forward.3} parent=0 // loop_header_branch
    %13 = sbr.rel (%p11) target = $region8
  $region5: #{input_layer_forward.3} parent=0 // loop_body
    %s15 = ssub.s32 %s10, 1
    %s16 = ssub.s32 %s10, 2
    %s17 = sadd.s32 %s10, 1
    %s18 = ssub.s32 %s10, %s17
    %p19 = scmp.eq.s32.totalorder %s18, 0
    %s21 = sadd.s32 %s20, 1
    %s22 = scalar_select %p19, %s20, %s21
    %p25 = pneg %p19
    %p26 = scmp.eq.s32.totalorder %s10, 1
    %p27 = por %p25, %p26
    %p28 = scmp.ne.s32.totalorder %s20, %s23
    %p29 = scmp.eq.s32.totalorder %s10, 0
    %p30 = por %p28, %p29
    %p31 = scmp.ne.s32.totalorder %s20, %s23
    %p32 = scmp.eq.s32.totalorder %s15, 1
    %p33 = por %p31, %p32
    %p34 = scmp.ne.s32.totalorder %s23, %s24
    %p35 = scmp.eq.s32.totalorder %s15, 0
    %p36 = por %p34, %p35
    %p37 = scmp.ne.s32.totalorder %s23, %s24
    %p38 = scmp.eq.s32.totalorder %s16, 1
    %p39 = por %p37, %p38
    %p41 = scmp.ne.s32.totalorder %s24, %s40
    %p42 = scmp.eq.s32.totalorder %s16, 0
    %p43 = por %p41, %p42
    %s45 = sadd.s32 %s44, 1
    %p48 = scmp.eq.s32.totalorder %s10, 1
    %p49 = scmp.ne.s32.totalorder %s44, %s46
    %p50 = scmp.eq.s32.totalorder %s10, 0
    %p51 = por %p49, %p50
    %p52 = scmp.ne.s32.totalorder %s44, %s46
    %p53 = scmp.eq.s32.totalorder %s15, 1
    %p54 = por %p52, %p53
    %p55 = scmp.ne.s32.totalorder %s46, %s47
    %p56 = scmp.eq.s32.totalorder %s15, 0
    %p57 = por %p55, %p56
    %p58 = scmp.ne.s32.totalorder %s46, %s47
    %p59 = scmp.eq.s32.totalorder %s16, 1
    %p60 = por %p58, %p59
    %p62 = scmp.ne.s32.totalorder %s47, %s61
    %p63 = scmp.eq.s32.totalorder %s16, 0
    %p64 = por %p62, %p63
    %s66 = sadd.s32 %s65, 1
    %p69 = scmp.eq.s32.totalorder %s10, 1
    %p70 = scmp.ne.s32.totalorder %s65, %s67
    %p71 = scmp.eq.s32.totalorder %s10, 0
    %p72 = por %p70, %p71
    %p73 = scmp.ne.s32.totalorder %s65, %s67
    %p74 = scmp.eq.s32.totalorder %s15, 1
    %p75 = por %p73, %p74
    %p76 = scmp.ne.s32.totalorder %s67, %s68
    %p77 = scmp.eq.s32.totalorder %s15, 0
    %p78 = por %p76, %p77
    %p79 = scmp.ne.s32.totalorder %s67, %s68
    %p80 = scmp.eq.s32.totalorder %s16, 1
    %p81 = por %p79, %p80
    %p83 = scmp.ne.s32.totalorder %s68, %s82
    %p84 = scmp.eq.s32.totalorder %s16, 0
    %p85 = por %p83, %p84
    %s87 = sadd.s32 %s86, 1
    %p90 = scmp.eq.s32.totalorder %s10, 1
    %p91 = scmp.ne.s32.totalorder %s86, %s88
    %p92 = scmp.eq.s32.totalorder %s10, 0
    %p93 = por %p91, %p92
    %p94 = scmp.ne.s32.totalorder %s86, %s88
    %p95 = scmp.eq.s32.totalorder %s15, 1
    %p96 = por %p94, %p95
    %p97 = scmp.ne.s32.totalorder %s88, %s89
    %p98 = scmp.eq.s32.totalorder %s15, 0
    %p99 = por %p97, %p98
    %p100 = scmp.ne.s32.totalorder %s88, %s89
    %p101 = scmp.eq.s32.totalorder %s16, 1
    %p102 = por %p100, %p101
    %p104 = scmp.ne.s32.totalorder %s89, %s103
    %p105 = scmp.eq.s32.totalorder %s16, 0
    %p106 = por %p104, %p105
    %s107 = ssub.s32 %s10, %s17
    %p108 = scmp.eq.s32.totalorder %s107, 0
    %s110 = sadd.s32 %s109, 1
    %s111 = scalar_select %p108, %s109, %s110
    %p114 = pneg %p108
    %p115 = scmp.eq.s32.totalorder %s10, 1
    %p116 = por %p114, %p115
    %p117 = scmp.ne.s32.totalorder %s109, %s112
    %p118 = scmp.eq.s32.totalorder %s10, 0
    %p119 = por %p117, %p118
    %p120 = scmp.ne.s32.totalorder %s109, %s112
    %p121 = scmp.eq.s32.totalorder %s15, 1
    %p122 = por %p120, %p121
    %p123 = scmp.ne.s32.totalorder %s112, %s113
    %p124 = scmp.eq.s32.totalorder %s15, 0
    %p125 = por %p123, %p124
    %p126 = scmp.ne.s32.totalorder %s112, %s113
    %p127 = scmp.eq.s32.totalorder %s16, 1
    %p128 = por %p126, %p127
    %p130 = scmp.ne.s32.totalorder %s113, %s129
    %p131 = scmp.eq.s32.totalorder %s16, 0
    %p132 = por %p130, %p131
    %p133 = scmp.le.s32.totalorder 1, %s10
    %p134 = scmp.lt.s32.totalorder %s10, 3
    %p135 = pnand %p133, %p134
    %p136 = pneg %p135
    // Predicated region
    $region9: #{input_layer_forward.3} parent=5 // pred_check
      _
    $region10: #{input_layer_forward.3} parent=5 // pred_check_branch
      %138 = sbr.rel (%p135) target = $region12
    $region11: #{input_layer_forward.3} parent=5 // pred_region
      %s139 = ssub.s32 %s10, 1
      // Predicated region
      $region13: #{input_layer_forward.3} parent=11 // pred_check
        %p140 = pneg %p57
      $region14: #{input_layer_forward.3} parent=11 // pred_check_branch
        %142 = sbr.rel (%p140) target = $region16
      $region15: #{input_layer_forward.3} parent=11 // pred_region
        _
      $region16: #{input_layer_forward.3} parent=11 // pred_fallthru
        _
      // Predicated region
      $region17: #{input_layer_forward.3} parent=11 // pred_check
        %p143 = pneg %p78
      $region18: #{input_layer_forward.3} parent=11 // pred_check_branch
        %145 = sbr.rel (%p143) target = $region20
      $region19: #{input_layer_forward.3} parent=11 // pred_region
        _
      $region20: #{input_layer_forward.3} parent=11 // pred_fallthru
        _
      // Predicated region
      $region21: #{input_layer_forward.3} parent=11 // pred_check
        %p146 = pneg %p99
      $region22: #{input_layer_forward.3} parent=11 // pred_check_branch
        %148 = sbr.rel (%p146) target = $region24
      $region23: #{input_layer_forward.3} parent=11 // pred_region
        _
      $region24: #{input_layer_forward.3} parent=11 // pred_fallthru
        _
    $region12: #{input_layer_forward.3} parent=5 // pred_fallthru
      _
    %p149 = scmp.lt.s32.totalorder %s10, 2
    // Predicated region
    $region25: #{input_layer_forward.3} parent=5 // pred_check
      %p150 = pneg %p149
    $region26: #{input_layer_forward.3} parent=5 // pred_check_branch
      %152 = sbr.rel (%p150) target = $region28
    $region27: #{input_layer_forward.3} parent=5 // pred_region
      // Predicated region
      $region29: #{input_layer_forward.3} parent=27 // pred_check
        %p153 = pneg %p30
      $region30: #{input_layer_forward.3} parent=27 // pred_check_branch
        %155 = sbr.rel (%p153) target = $region32
      $region31: #{input_layer_forward.3} parent=27 // pred_region
        %s156 = smul.u32 3, %s10
        %p157 = scmp.lt.s32.totalorder %s156, 5
        %s158 = scalar_select %p157, %s156, 5
        %s159 = smul.addr %s158, 4
        %s160 = scalar_lea.vmem %s0, %s159
        %s161 = smul.u32 3, %s10
      $region32: #{input_layer_forward.3} parent=27 // pred_fallthru
        _
    $region28: #{input_layer_forward.3} parent=5 // pred_fallthru
      _
    %p162 = scmp.le.s32.totalorder 1, %s10
    %p163 = scmp.lt.s32.totalorder %s10, 3
    %p164 = pnand %p162, %p163
    %p165 = pneg %p164
    // Predicated region
    $region33: #{input_layer_forward.3} parent=5 // pred_check
      _
    $region34: #{input_layer_forward.3} parent=5 // pred_check_branch
      %167 = sbr.rel (%p164) target = $region36
    $region35: #{input_layer_forward.3} parent=5 // pred_region
      %s168 = ssub.s32 %s10, 1
      %s169 = smul.u32 3, %s15
      %p170 = scmp.lt.s32.totalorder %s169, 5
      %s171 = scalar_select %p170, %s169, 5
      %s172 = smul.addr %s171, 4
      %s173 = scalar_lea.vmem %s0, %s172
      %p174 = pneg %p36
      %p175 = pneg %p33
      %p176 = pneg %p57
      %p177 = pneg %p54
      %p178 = pneg %p78
      %p179 = pneg %p75
      %p180 = pneg %p99
      %p181 = pneg %p96
      %p182 = pneg %p125
      %p183 = pneg %p122
      %p184 = scmp.lt.s32.totalorder %s15, 1
      %s185 = scalar_select %p184, %s15, 1
      %s186 = smul.addr %s185, 16
      %s187 = smul.addr %s186, 8
      %s188 = scalar_lea.vmem %s4, %s187
      %s189 = smul.u32 3, %s15
      %p190 = scmp.lt.s32.totalorder %s189, 5
      %s191 = scalar_select %p190, %s189, 5
      %s192 = smul.addr %s191, 4
      %s193 = scalar_lea.vmem %s0, %s192
      %s194 = smul.u32 3, %s15
      %p195 = scmp.lt.s32.totalorder %s15, 1
      %s196 = scalar_select %p195, %s15, 1
      %s197 = smul.addr %s196, 16
      %s198 = smul.addr %s197, 8
      %s199 = scalar_lea.vmem %s4, %s198
      %v200 = vlaneseq
      %v201 = vand.u32 %v200, 127
      %v202 = vadd.s32 %v201, 128
      %vm203 = vcmp.lt.s32.totalorder %v201, 0
      %v204 = vsub.s32 0, %v201
      %v205 = vsel %vm203, %v204, %v201
      %v206 = vshrl.u32 %v205, 4
      %v207 = vand.u32 %v205, 15
      %v208 = vsub.s32 0, %v207
      %v209 = vsel %vm203, %v208, %v207
      %vm210 = vcmp.lt.s32.totalorder %v202, 0
      %v211 = vsub.s32 0, %v202
      %v212 = vsel %vm210, %v211, %v202
      %v213 = vshrl.u32 %v212, 4
      %v214 = vand.u32 %v212, 15
      %v215 = vsub.s32 0, %v214
      %v216 = vsel %vm210, %v215, %v214
      %vm217 = vcmp.ne.s32.totalorder %v209, 0
      %vm218 = vcmp.ne.s32.totalorder %v216, 0
      %vm219 = vcmp.lt.s32.totalorder %v209, 0
      %vm220 = vcmp.lt.s32.totalorder %v216, 0
      %vm221 = vmand %vm219, %vm217
      %vm222 = vmand %vm220, %vm218
      %v223 = vadd.s32 %v209, 16
      %v224 = vadd.s32 %v216, 16
      %v225 = vsel %vm221, %v223, %v209
      %v226 = vsel %vm222, %v224, %v216
      %vm227 = vcmp.ne.s32.totalorder %v225, 0
      %vm228 = vcmp.ne.s32.totalorder %v226, 0
      %vm229 = vcmp.ne.s32.totalorder %v225, 15
      %vm230 = vcmp.ne.s32.totalorder %v226, 15
      %231 = vst [vmem:[#allocation2 + $0x30] sm:$0xf8] 0.0
      %232 = vst [vmem:[#allocation2 + $0x38] sm:$0xf8] 0.0
      %v233 = vld [vmem:[%s193] sm:$0x77]
      %v234 = vld [vmem:[%s193 + $0x8] sm:$0x7]
      %v235 = vsel %vm227, 1, 0
      %v236 = vsel %vm228, 1, 0
      %vm237 = vcmp.eq.s32.totalorder %v235, 1
      %vm238 = vcmp.eq.s32.totalorder %v236, 1
      %v241 = vcombine.high %v233, %v233
      %242 = vrot.lane.b32.xlu0 %v233, 105
      %v243 = vpop.permute.xlu0 %242
      %244 = vrot.lane.b32.xlu0 %v241, 105
      %v245 = vpop.permute.xlu0 %244
      %246 = vrot.lane.b32.xlu0 %v234, 105
      %v247 = vpop.permute.xlu0 %246
      %vm248 = vcmask 859136
      %v249 = vsel %vm248, %v243, %v245
      %v250 = vsel %vm248, %v245, %v247
      %v253 = vsel %vm237, %v249, 0.0
      %v254 = vsel %vm238, %v250, 0.0
      %255 = vst [vmem:[#allocation2] sm:$0x7] %v253
      %256 = vst [vmem:[#allocation2 + $0x8] sm:$0x7] %v254
      %v257 = vld [vmem:[%s193] sm:$0x77]
      %v258 = vld [vmem:[%s193 + $0x8] sm:$0x7]
      %v261 = vcombine.high %v257, %v257
      %v262 = vrot.slane %v257, 5
      %v263 = vrot.slane %v261, 5
      %v264 = vrot.slane %v258, 5
      %265 = vrot.lane.b32.xlu0 %v262, 104
      %v266 = vpop.permute.xlu0 %265
      %267 = vrot.lane.b32.xlu0 %v263, 104
      %v268 = vpop.permute.xlu0 %267
      %269 = vrot.lane.b32.xlu0 %v264, 104
      %v270 = vpop.permute.xlu0 %269
      %vm271 = vcmask 850944
      %v272 = vsel %vm271, %v266, %v268
      %v273 = vsel %vm271, %v268, %v270
      %276 = vst [vmem:[#allocation2] sm:$0x38] %v272
      %277 = vst [vmem:[#allocation2 + $0x8] sm:$0x38] %v273
      %v278 = vld [vmem:[%s193] sm:$0x77]
      %v279 = vld [vmem:[%s193 + $0x8] sm:$0x7]
      %v280 = vsel %vm229, 1, 0
      %v281 = vsel %vm230, 1, 0
      %vm282 = vcmp.eq.s32.totalorder %v280, 1
      %vm283 = vcmp.eq.s32.totalorder %v281, 1
      %v286 = vcombine.high %v278, %v278
      %287 = vrot.lane.b32.xlu0 %v278, 103
      %v288 = vpop.permute.xlu0 %287
      %289 = vrot.lane.b32.xlu0 %v286, 103
      %v290 = vpop.permute.xlu0 %289
      %291 = vrot.lane.b32.xlu0 %v279, 103
      %v292 = vpop.permute.xlu0 %291
      %vm293 = vcmask 842752
      %v294 = vsel %vm293, %v288, %v290
      %v295 = vsel %vm293, %v290, %v292
      %v298 = vsel %vm282, %v294, 0.0
      %v299 = vsel %vm283, %v295, 0.0
      %v302 = vrot.slane %v298, 2
      %v303 = vrot.slane %v299, 2
      %306 = vst [vmem:[#allocation2] sm:$0xc0] %v302
      %307 = vst [vmem:[#allocation2 + $0x8] sm:$0xc0] %v303
      %308 = vst [vmem:[#allocation2 + $0x10] sm:$0x1] %v302
      %309 = vst [vmem:[#allocation2 + $0x18] sm:$0x1] %v303
      %v310 = vld [vmem:[%s193] sm:$0x77]
      %v311 = vld [vmem:[%s193 + $0x8] sm:$0x7]
      %v314 = vcombine.high %v310, %v310
      %315 = vrot.lane.b32.xlu0 %v310, 89
      %v316 = vpop.permute.xlu0 %315
      %317 = vrot.lane.b32.xlu0 %v314, 89
      %v318 = vpop.permute.xlu0 %317
      %319 = vrot.lane.b32.xlu0 %v311, 89
      %v320 = vpop.permute.xlu0 %319
      %vm321 = vcmask 728064
      %v322 = vsel %vm321, %v316, %v318
      %v323 = vsel %vm321, %v318, %v320
      %v326 = vsel %vm237, %v322, 0.0
      %v327 = vsel %vm238, %v323, 0.0
      %v330 = vrot.slane %v326, 7
      %v331 = vrot.slane %v327, 7
      %334 = vst [vmem:[#allocation2 + $0x10] sm:$0xe] %v330
      %335 = vst [vmem:[#allocation2 + $0x18] sm:$0xe] %v331
      %v336 = vld [vmem:[%s193] sm:$0x77]
      %v337 = vld [vmem:[%s193 + $0x8] sm:$0x7]
      %v340 = vcombine.low %v336, %v336
      %v341 = vcombine.low %v337, %v337
      %342 = vrot.lane.b32.xlu0 %v340, 88
      %v343 = vpop.permute.xlu0 %342
      %344 = vrot.lane.b32.xlu0 %v336, 88
      %v345 = vpop.permute.xlu0 %344
      %346 = vrot.lane.b32.xlu0 %v341, 88
      %v347 = vpop.permute.xlu0 %346
      %vm348 = vcmask 719872
      %v349 = vsel %vm348, %v343, %v345
      %v350 = vsel %vm348, %v345, %v347
      %353 = vst [vmem:[#allocation2 + $0x10] sm:$0x70] %v349
      %354 = vst [vmem:[#allocation2 + $0x18] sm:$0x70] %v350
      %v355 = vld [vmem:[%s193] sm:$0x77]
      %v356 = vld [vmem:[%s193 + $0x8] sm:$0x7]
      %v359 = vcombine.high %v355, %v355
      %360 = vrot.lane.b32.xlu0 %v355, 87
      %v361 = vpop.permute.xlu0 %360
      %362 = vrot.lane.b32.xlu0 %v359, 87
      %v363 = vpop.permute.xlu0 %362
      %364 = vrot.lane.b32.xlu0 %v356, 87
      %v365 = vpop.permute.xlu0 %364
      %vm366 = vcmask 711680
      %v367 = vsel %vm366, %v361, %v363
      %v368 = vsel %vm366, %v363, %v365
      %v371 = vsel %vm282, %v367, 0.0
      %v372 = vsel %vm283, %v368, 0.0
      %v375 = vrot.slane %v371, 1
      %v376 = vrot.slane %v372, 1
      %379 = vst [vmem:[#allocation2 + $0x10] sm:$0x80] %v375
      %380 = vst [vmem:[#allocation2 + $0x18] sm:$0x80] %v376
      %381 = vst [vmem:[#allocation2 + $0x20] sm:$0x3] %v375
      %382 = vst [vmem:[#allocation2 + $0x28] sm:$0x3] %v376
      %v383 = vld [vmem:[%s193] sm:$0x77]
      %v384 = vld [vmem:[%s193 + $0x8] sm:$0x7]
      %v387 = vcombine.high %v383, %v383
      %388 = vrot.lane.b32.xlu0 %v383, 73
      %v389 = vpop.permute.xlu0 %388
      %390 = vrot.lane.b32.xlu0 %v387, 73
      %v391 = vpop.permute.xlu0 %390
      %392 = vrot.lane.b32.xlu0 %v384, 73
      %v393 = vpop.permute.xlu0 %392
      %vm394 = vcmask 596992
      %v395 = vsel %vm394, %v389, %v391
      %v396 = vsel %vm394, %v391, %v393
      %v399 = vsel %vm237, %v395, 0.0
      %v400 = vsel %vm238, %v396, 0.0
      %v403 = vrot.slane %v399, 6
      %v404 = vrot.slane %v400, 6
      %407 = vst [vmem:[#allocation2 + $0x20] sm:$0x1c] %v403
      %408 = vst [vmem:[#allocation2 + $0x28] sm:$0x1c] %v404
      %v409 = vld [vmem:[%s193] sm:$0x77]
      %v410 = vld [vmem:[%s193 + $0x8] sm:$0x7]
      %v413 = vcombine.high %v409, %v409
      %v414 = vrot.slane %v409, 3
      %v415 = vrot.slane %v413, 3
      %v416 = vrot.slane %v410, 3
      %417 = vrot.lane.b32.xlu0 %v414, 72
      %v418 = vpop.permute.xlu0 %417
      %419 = vrot.lane.b32.xlu0 %v415, 72
      %v420 = vpop.permute.xlu0 %419
      %421 = vrot.lane.b32.xlu0 %v416, 72
      %v422 = vpop.permute.xlu0 %421
      %vm423 = vcmask 588800
      %v424 = vsel %vm423, %v418, %v420
      %v425 = vsel %vm423, %v420, %v422
      %428 = vst [vmem:[#allocation2 + $0x20] sm:$0xe0] %v424
      %429 = vst [vmem:[#allocation2 + $0x28] sm:$0xe0] %v425
      %v430 = vld [vmem:[%s193] sm:$0x77]
      %v431 = vld [vmem:[%s193 + $0x8] sm:$0x7]
      %v434 = vcombine.high %v430, %v430
      %435 = vrot.lane.b32.xlu0 %v430, 71
      %v436 = vpop.permute.xlu0 %435
      %437 = vrot.lane.b32.xlu0 %v434, 71
      %v438 = vpop.permute.xlu0 %437
      %439 = vrot.lane.b32.xlu0 %v431, 71
      %v440 = vpop.permute.xlu0 %439
      %vm441 = vcmask 580608
      %v442 = vsel %vm441, %v436, %v438
      %v443 = vsel %vm441, %v438, %v440
      %v446 = vsel %vm282, %v442, 0.0
      %v447 = vsel %vm283, %v443, 0.0
      %448 = vst [vmem:[#allocation2 + $0x30] sm:$0x7] %v446
      %449 = vst [vmem:[#allocation2 + $0x38] sm:$0x7] %v447
      %v450 = vld [vmem:[%s1] sm:$0xff]
      %v451 = vld [vmem:[%s1 + $0x8] sm:$0xff]
      %v452 = vld [vmem:[%s1 + $0x10] sm:$0xff]
      %v453 = vld [vmem:[%s1 + $0x18] sm:$0xff]
      %v454 = vld [vmem:[%s1 + $0x20] sm:$0xff]
      %v455 = vld [vmem:[%s1 + $0x28] sm:$0xff]
      %v456 = vld [vmem:[%s1 + $0x30] sm:$0xff]
      %v457 = vld [vmem:[%s1 + $0x38] sm:$0xff]
      %v458 = vld [vmem:[#allocation2] sm:$0xff]
      %v459 = vld [vmem:[#allocation2 + $0x8] sm:$0xff]
      %v460 = vld [vmem:[#allocation2 + $0x10] sm:$0xff]
      %v461 = vld [vmem:[#allocation2 + $0x18] sm:$0xff]
      %v462 = vld [vmem:[#allocation2 + $0x20] sm:$0xff]
      %v463 = vld [vmem:[#allocation2 + $0x28] sm:$0xff]
      %v464 = vld [vmem:[#allocation2 + $0x30] sm:$0xff]
      %v465 = vld [vmem:[#allocation2 + $0x38] sm:$0xff]
      %vm466 = vcmask 261120
      %v468 = vsel %vm466, %v450, 0
      %v471 = vsel %vm466, %v451, 0
      %v474 = vsel %vm466, %v452, 0
      %v477 = vsel %vm466, %v453, 0
      %v480 = vsel %vm466, %v454, 0
      %v483 = vsel %vm466, %v455, 0
      %v486 = vsel %vm466, %v456, 0
      %v489 = vsel %vm466, %v457, 0
      %491 = vmatprep.subr.mxu0 0.0
      %492 = vmatpush1.msra.mxu0 0.0
      %493 = vmatprep.subr.mxu0 0.0
      %494 = vmatpush1.msra.mxu0 0.0
      %495 = vmatprep.subr.mxu0 0.0
      %496 = vmatpush1.msra.mxu0 0.0
      %497 = vmatprep.subr.mxu0 0.0
      %498 = vmatpush1.msra.mxu0 0.0
      %499 = vmatprep.subr.mxu0 0.0
      %500 = vmatpush1.msra.mxu0 0.0
      %501 = vmatprep.subr.mxu0 0.0
      %502 = vmatpush1.msra.mxu0 0.0
      %503 = vmatprep.subr.mxu0 0.0
      %504 = vmatpush1.msra.mxu0 0.0
      %505 = vmatprep.subr.mxu0 0.0
      %506 = vmatpush1.msra.mxu0 0.0
      %507 = vmatprep.subr.mxu0 0.0
      %508 = vmatpush1.msra.mxu0 0.0
      %509 = vmatprep.subr.mxu0 0.0
      %510 = vmatpush1.msra.mxu0 0.0
      %511 = vmatprep.subr.mxu0 0.0
      %512 = vmatpush1.msra.mxu0 0.0
      %513 = vmatprep.subr.mxu0 0.0
      %514 = vmatpush1.msra.mxu0 0.0
      %515 = vmatprep.subr.mxu0 %v465
      %516 = vmatpush1.msra.mxu0 %v464
      %517 = vmatprep.subr.mxu0 %v463
      %518 = vmatpush1.msra.mxu0 %v462
      %519 = vmatprep.subr.mxu0 %v461
      %520 = vmatpush1.msra.mxu0 %v460
      %521 = vmatprep.subr.mxu0 %v459
      %522 = vmatpush1.msra.mxu0 %v458
      %523 = vmatprep.subr.mxu0 0.0
      %524 = vmatpush2.msra.mxu0 0.0
      %525 = vmatprep.subr.mxu0 0.0
      %526 = vmatpush2.msra.mxu0 0.0
      %527 = vmatprep.subr.mxu0 0.0
      %528 = vmatpush2.msra.mxu0 0.0
      %529 = vmatprep.subr.mxu0 0.0
      %530 = vmatpush2.msra.mxu0 0.0
      %531 = vmatprep.subr.mxu0 0.0
      %532 = vmatpush2.msra.mxu0 0.0
      %533 = vmatprep.subr.mxu0 0.0
      %534 = vmatpush2.msra.mxu0 0.0
      %535 = vmatprep.subr.mxu0 0.0
      %536 = vmatpush2.msra.mxu0 0.0
      %537 = vmatprep.subr.mxu0 0.0
      %538 = vmatpush2.msra.mxu0 0.0
      %539 = vmatprep.subr.mxu0 0.0
      %540 = vmatpush2.msra.mxu0 0.0
      %541 = vmatprep.subr.mxu0 0.0
      %542 = vmatpush2.msra.mxu0 0.0
      %543 = vmatprep.subr.mxu0 0.0
      %544 = vmatpush2.msra.mxu0 0.0
      %545 = vmatprep.subr.mxu0 0.0
      %546 = vmatpush2.msra.mxu0 0.0
      %547 = vmatprep.subr.mxu0 0.0
      %548 = vmatpush2.msra.mxu0 0.0
      %549 = vmatprep.subr.mxu0 0.0
      %550 = vmatpush2.msra.mxu0 0.0
      %551 = vmatprep.subr.mxu0 0.0
      %552 = vmatpush2.msra.mxu0 0.0
      %553 = vmatprep.subr.mxu0 0.0
      %554 = vmatpush2.msra.mxu0 0.0
      %555 = vmatprep.mubr.f32.mxu0 0.0
      %556 = vmatmul.mubr.f32.gmra.mxu0 %v468
      %v557 = vpop.f32.mrf.mxu0
      %v558 = vadd.f32 0.0, %v557
      %v559 = vpop.f32.mrf.mxu0
      %v560 = vadd.f32 0.0, %v559
      %561 = vmatprep.mubr.f32.mxu0 0.0
      %562 = vmatmul.mubr.f32.gmra.mxu0 %v471
      %v563 = vpop.f32.mrf.mxu0
      %v564 = vadd.f32 0.0, %v563
      %v565 = vpop.f32.mrf.mxu0
      %v566 = vadd.f32 0.0, %v565
      %567 = vmatprep.mubr.f32.mxu0 0.0
      %568 = vmatmul.mubr.f32.gmra.mxu0 %v474
      %v569 = vpop.f32.mrf.mxu0
      %v570 = vadd.f32 0.0, %v569
      %v571 = vpop.f32.mrf.mxu0
      %v572 = vadd.f32 0.0, %v571
      %573 = vmatprep.mubr.f32.mxu0 0.0
      %574 = vmatmul.mubr.f32.gmra.mxu0 %v477
      %v575 = vpop.f32.mrf.mxu0
      %v576 = vadd.f32 0.0, %v575
      %v577 = vpop.f32.mrf.mxu0
      %v578 = vadd.f32 0.0, %v577
      %579 = vmatprep.mubr.f32.mxu0 0.0
      %580 = vmatmul.mubr.f32.gmra.mxu0 %v480
      %v581 = vpop.f32.mrf.mxu0
      %v582 = vadd.f32 0.0, %v581
      %v583 = vpop.f32.mrf.mxu0
      %v584 = vadd.f32 0.0, %v583
      %585 = vmatprep.mubr.f32.mxu0 0.0
      %586 = vmatmul.mubr.f32.gmra.mxu0 %v483
      %v587 = vpop.f32.mrf.mxu0
      %v588 = vadd.f32 0.0, %v587
      %v589 = vpop.f32.mrf.mxu0
      %v590 = vadd.f32 0.0, %v589
      %591 = vmatprep.mubr.f32.mxu0 0.0
      %592 = vmatmul.mubr.f32.gmra.mxu0 %v486
      %v593 = vpop.f32.mrf.mxu0
      %v594 = vadd.f32 0.0, %v593
      %v595 = vpop.f32.mrf.mxu0
      %v596 = vadd.f32 0.0, %v595
      %597 = vmatprep.mubr.f32.mxu0 0.0
      %598 = vmatmul.mubr.f32.gmra.mxu0 %v489
      %v599 = vpop.f32.mrf.mxu0
      %v600 = vadd.f32 0.0, %v599
      %v601 = vpop.f32.mrf.mxu0
      %v602 = vadd.f32 0.0, %v601
      %603 = vdwg.mxu0
      %v604 = vld [vmem:[%s2] sm:$0xff]
      %v605 = vld [vmem:[%s2 + $0x8] sm:$0xff]
      %v606 = vld [vmem:[%s2 + $0x10] sm:$0xff]
      %v607 = vld [vmem:[%s2 + $0x18] sm:$0xff]
      %v608 = vld [vmem:[%s2 + $0x20] sm:$0xff]
      %v609 = vld [vmem:[%s2 + $0x28] sm:$0xff]
      %v610 = vld [vmem:[%s2 + $0x30] sm:$0xff]
      %v611 = vld [vmem:[%s2 + $0x38] sm:$0xff]
      %613 = vset.pattern.permute.xlu0 0
      %614 = vperm.xlu0 %613, %v604
      %v615 = vpop.permute.xlu0 %614
      %618 = vset.pattern.permute.xlu0 0
      %619 = vperm.xlu0 %618, %v605
      %v620 = vpop.permute.xlu0 %619
      %623 = vset.pattern.permute.xlu0 0
      %624 = vperm.xlu0 %623, %v606
      %v625 = vpop.permute.xlu0 %624
      %628 = vset.pattern.permute.xlu0 0
      %629 = vperm.xlu0 %628, %v607
      %v630 = vpop.permute.xlu0 %629
      %633 = vset.pattern.permute.xlu0 0
      %634 = vperm.xlu0 %633, %v608
      %v635 = vpop.permute.xlu0 %634
      %638 = vset.pattern.permute.xlu0 0
      %639 = vperm.xlu0 %638, %v609
      %v640 = vpop.permute.xlu0 %639
      %643 = vset.pattern.permute.xlu0 0
      %644 = vperm.xlu0 %643, %v610
      %v645 = vpop.permute.xlu0 %644
      %648 = vset.pattern.permute.xlu0 0
      %649 = vperm.xlu0 %648, %v611
      %v650 = vpop.permute.xlu0 %649
      %v652 = vmul.f32 %v558, %v615
      %v653 = vmul.f32 %v560, %v615
      %v654 = vmul.f32 %v564, %v620
      %v655 = vmul.f32 %v566, %v620
      %v656 = vmul.f32 %v570, %v625
      %v657 = vmul.f32 %v572, %v625
      %v658 = vmul.f32 %v576, %v630
      %v659 = vmul.f32 %v578, %v630
      %v660 = vmul.f32 %v582, %v635
      %v661 = vmul.f32 %v584, %v635
      %v662 = vmul.f32 %v588, %v640
      %v663 = vmul.f32 %v590, %v640
      %v664 = vmul.f32 %v594, %v645
      %v665 = vmul.f32 %v596, %v645
      %v666 = vmul.f32 %v600, %v650
      %v667 = vmul.f32 %v602, %v650
      %v668 = vld [vmem:[%s3] sm:$0xff]
      %v669 = vld [vmem:[%s3 + $0x8] sm:$0xff]
      %v670 = vld [vmem:[%s3 + $0x10] sm:$0xff]
      %v671 = vld [vmem:[%s3 + $0x18] sm:$0xff]
      %v672 = vld [vmem:[%s3 + $0x20] sm:$0xff]
      %v673 = vld [vmem:[%s3 + $0x28] sm:$0xff]
      %v674 = vld [vmem:[%s3 + $0x30] sm:$0xff]
      %v675 = vld [vmem:[%s3 + $0x38] sm:$0xff]
      %677 = vset.pattern.permute.xlu0 0
      %678 = vperm.xlu0 %677, %v668
      %v679 = vpop.permute.xlu0 %678
      %682 = vset.pattern.permute.xlu0 0
      %683 = vperm.xlu0 %682, %v669
      %v684 = vpop.permute.xlu0 %683
      %687 = vset.pattern.permute.xlu0 0
      %688 = vperm.xlu0 %687, %v670
      %v689 = vpop.permute.xlu0 %688
      %692 = vset.pattern.permute.xlu0 0
      %693 = vperm.xlu0 %692, %v671
      %v694 = vpop.permute.xlu0 %693
      %697 = vset.pattern.permute.xlu0 0
      %698 = vperm.xlu0 %697, %v672
      %v699 = vpop.permute.xlu0 %698
      %702 = vset.pattern.permute.xlu0 0
      %703 = vperm.xlu0 %702, %v673
      %v704 = vpop.permute.xlu0 %703
      %707 = vset.pattern.permute.xlu0 0
      %708 = vperm.xlu0 %707, %v674
      %v709 = vpop.permute.xlu0 %708
      %712 = vset.pattern.permute.xlu0 0
      %713 = vperm.xlu0 %712, %v675
      %v714 = vpop.permute.xlu0 %713
      %v716 = vadd.f32 %v652, %v679
      %v717 = vadd.f32 %v653, %v679
      %v718 = vadd.f32 %v654, %v684
      %v719 = vadd.f32 %v655, %v684
      %v720 = vadd.f32 %v656, %v689
      %v721 = vadd.f32 %v657, %v689
      %v722 = vadd.f32 %v658, %v694
      %v723 = vadd.f32 %v659, %v694
      %v724 = vadd.f32 %v660, %v699
      %v725 = vadd.f32 %v661, %v699
      %v726 = vadd.f32 %v662, %v704
      %v727 = vadd.f32 %v663, %v704
      %v728 = vadd.f32 %v664, %v709
      %v729 = vadd.f32 %v665, %v709
      %v730 = vadd.f32 %v666, %v714
      %v731 = vadd.f32 %v667, %v714
      %v732 = vmax.f32 %v716, 0.0
      %v733 = vmax.f32 %v717, 0.0
      %v734 = vmax.f32 %v718, 0.0
      %v735 = vmax.f32 %v719, 0.0
      %v736 = vmax.f32 %v720, 0.0
      %v737 = vmax.f32 %v721, 0.0
      %v738 = vmax.f32 %v722, 0.0
      %v739 = vmax.f32 %v723, 0.0
      %v740 = vmax.f32 %v724, 0.0
      %v741 = vmax.f32 %v725, 0.0
      %v742 = vmax.f32 %v726, 0.0
      %v743 = vmax.f32 %v727, 0.0
      %v744 = vmax.f32 %v728, 0.0
      %v745 = vmax.f32 %v729, 0.0
      %v746 = vmax.f32 %v730, 0.0
      %v747 = vmax.f32 %v731, 0.0
      %748 = vst [vmem:[%s199] sm:$0xff] %v732
      %749 = vst [vmem:[%s199 + $0x8] sm:$0xff] %v733
      %750 = vst [vmem:[%s199 + $0x10] sm:$0xff] %v734
      %751 = vst [vmem:[%s199 + $0x18] sm:$0xff] %v735
      %752 = vst [vmem:[%s199 + $0x20] sm:$0xff] %v736
      %753 = vst [vmem:[%s199 + $0x28] sm:$0xff] %v737
      %754 = vst [vmem:[%s199 + $0x30] sm:$0xff] %v738
      %755 = vst [vmem:[%s199 + $0x38] sm:$0xff] %v739
      %756 = vst [vmem:[%s199 + $0x40] sm:$0xff] %v740
      %757 = vst [vmem:[%s199 + $0x48] sm:$0xff] %v741
      %758 = vst [vmem:[%s199 + $0x50] sm:$0xff] %v742
      %759 = vst [vmem:[%s199 + $0x58] sm:$0xff] %v743
      %760 = vst [vmem:[%s199 + $0x60] sm:$0xff] %v744
      %761 = vst [vmem:[%s199 + $0x68] sm:$0xff] %v745
      %762 = vst [vmem:[%s199 + $0x70] sm:$0xff] %v746
      %763 = vst [vmem:[%s199 + $0x78] sm:$0xff] %v747
      %p764 = scmp.lt.s32.totalorder %s15, 1
      %s765 = scalar_select %p764, %s15, 1
      %s766 = smul.addr %s765, 16
      %s767 = smul.addr %s766, 8
      %s768 = scalar_lea.vmem %s4, %s767
      // Predicated region
      $region37: #{input_layer_forward.3} parent=35 // pred_check
        %p769 = pneg %p122
      $region38: #{input_layer_forward.3} parent=35 // pred_check_branch
        %771 = sbr.rel (%p769) target = $region40
      $region39: #{input_layer_forward.3} parent=35 // pred_region
        _
      $region40: #{input_layer_forward.3} parent=35 // pred_fallthru
        _
    $region36: #{input_layer_forward.3} parent=5 // pred_fallthru
      _
    %p772 = scmp.le.s32.totalorder 2, %s10
    // Predicated region
    $region41: #{input_layer_forward.3} parent=5 // pred_check
      %p773 = pneg %p772
    $region42: #{input_layer_forward.3} parent=5 // pred_check_branch
      %775 = sbr.rel (%p773) target = $region44
    $region43: #{input_layer_forward.3} parent=5 // pred_region
      %s776 = ssub.s32 %s10, 2
      // Predicated region
      $region45: #{input_layer_forward.3} parent=43 // pred_check
        %p777 = pneg %p128
      $region46: #{input_layer_forward.3} parent=43 // pred_check_branch
        %779 = sbr.rel (%p777) target = $region48
      $region47: #{input_layer_forward.3} parent=43 // pred_region
        %p780 = scmp.lt.s32.totalorder %s16, 1
        %s781 = scalar_select %p780, %s16, 1
        %s782 = smul.addr %s781, 16
        %s783 = smul.addr %s782, 8
        %s784 = scalar_lea.vmem %s4, %s783
      $region48: #{input_layer_forward.3} parent=43 // pred_fallthru
        _
    $region44: #{input_layer_forward.3} parent=5 // pred_fallthru
      _
  $region6: #{input_layer_forward.3} parent=0 // loop_footer
    %s14 = sadd.s32 1, %s10
  $region7: #{input_layer_forward.3} parent=0 // loop_footer_branch
    %9 = sbr.rel target = $region3
  $region8: #{input_layer_forward.3} parent=0 // loop_exit
    _

// kernel: input_layer_forward.2
$region0: #{input_layer_forward.2}
  #allocation0 [shape = 'u32[]', space=smem, size = 0x4, offset = 0x4, fixed_abs, tag = 'smem constant byte address 0x4 - core index']
  #allocation1 [shape = 'u32[144,128]{1,0:T(1,128)}', space=vmem, size = 0x12000, scoped, tag = 'internal scratch']
  #allocation2 [shape = 'f32[32,256]{1,0:T(8,128)}', space=vmem, size = 0x8000, scoped, tag = 'scratch operand']
  %s0 = inlined_call_operand.vmem [shape: f32[3,768], index: 0, kind: input, shape index: {}]
  %s1 = inlined_call_operand.vmem [shape: f32[64,32], index: 1, kind: input, shape index: {}]
  %s2 = inlined_call_operand.vmem [shape: f32[2,64,2], index: 2, kind: output, shape index: {}]
  %s3 = sld [smem:[#allocation0]]
  $region41: #{input_layer_forward.2} parent=0
    _
  %s5 = ssub.s32 1, %s3
  %s6 = scalar_select 0, %s5, %s3
  loop: start=0, step=1, limit=4
  $region2: #{input_layer_forward.2} parent=0 // loop_pre_header
    _
  $region3: #{input_layer_forward.2} parent=0 // loop_header
    %s8 = sphi 0, %s12
    %p9 = scmp.ge.s32.totalorder %s8, 4
    %s18 = sphi 0, %s20
    %s21 = sphi 0, %s18
    %s22 = sphi 0, %s21
    %s38 = sphi 0, %s22
    %s42 = sphi 0, %s42
    %s44 = sphi 0, %s42
    %s45 = sphi 0, %s44
    %s59 = sphi 0, %s45
    %s65 = sphi 0, %s67
    %s68 = sphi 0, %s65
    %s69 = sphi 0, %s68
    %s85 = sphi 0, %s69
  $region4: #{input_layer_forward.2} parent=0 // loop_header_branch
    %11 = sbr.rel (%p9) target = $region8
  $region5: #{input_layer_forward.2} parent=0 // loop_body
    %s13 = ssub.s32 %s8, 1
    %s14 = ssub.s32 %s8, 2
    %s15 = sadd.s32 %s8, 1
    %s16 = ssub.s32 %s8, %s15
    %p17 = scmp.eq.s32.totalorder %s16, 0
    %s19 = sadd.s32 %s18, 1
    %s20 = scalar_select %p17, %s18, %s19
    %p23 = pneg %p17
    %p24 = scmp.eq.s32.totalorder %s8, 1
    %p25 = por %p23, %p24
    %p26 = scmp.ne.s32.totalorder %s18, %s21
    %p27 = scmp.eq.s32.totalorder %s8, 0
    %p28 = por %p26, %p27
    %p29 = scmp.ne.s32.totalorder %s18, %s21
    %p30 = scmp.eq.s32.totalorder %s13, 1
    %p31 = por %p29, %p30
    %p32 = scmp.ne.s32.totalorder %s21, %s22
    %p33 = scmp.eq.s32.totalorder %s13, 0
    %p34 = por %p32, %p33
    %p35 = scmp.ne.s32.totalorder %s21, %s22
    %p36 = scmp.eq.s32.totalorder %s14, 1
    %p37 = por %p35, %p36
    %p39 = scmp.ne.s32.totalorder %s22, %s38
    %p40 = scmp.eq.s32.totalorder %s14, 0
    %p41 = por %p39, %p40
    %s43 = sadd.s32 %s42, 1
    %p46 = scmp.eq.s32.totalorder %s8, 1
    %p47 = scmp.ne.s32.totalorder %s42, %s44
    %p48 = scmp.eq.s32.totalorder %s8, 0
    %p49 = por %p47, %p48
    %p50 = scmp.ne.s32.totalorder %s42, %s44
    %p51 = scmp.eq.s32.totalorder %s13, 1
    %p52 = por %p50, %p51
    %p53 = scmp.ne.s32.totalorder %s44, %s45
    %p54 = scmp.eq.s32.totalorder %s13, 0
    %p55 = por %p53, %p54
    %p56 = scmp.ne.s32.totalorder %s44, %s45
    %p57 = scmp.eq.s32.totalorder %s14, 1
    %p58 = por %p56, %p57
    %p60 = scmp.ne.s32.totalorder %s45, %s59
    %p61 = scmp.eq.s32.totalorder %s14, 0
    %p62 = por %p60, %p61
    %s63 = ssub.s32 %s8, %s15
    %p64 = scmp.eq.s32.totalorder %s63, 0
    %s66 = sadd.s32 %s65, 1
    %s67 = scalar_select %p64, %s65, %s66
    %p70 = pneg %p64
    %p71 = scmp.eq.s32.totalorder %s8, 1
    %p72 = por %p70, %p71
    %p73 = scmp.ne.s32.totalorder %s65, %s68
    %p74 = scmp.eq.s32.totalorder %s8, 0
    %p75 = por %p73, %p74
    %p76 = scmp.ne.s32.totalorder %s65, %s68
    %p77 = scmp.eq.s32.totalorder %s13, 1
    %p78 = por %p76, %p77
    %p79 = scmp.ne.s32.totalorder %s68, %s69
    %p80 = scmp.eq.s32.totalorder %s13, 0
    %p81 = por %p79, %p80
    %p82 = scmp.ne.s32.totalorder %s68, %s69
    %p83 = scmp.eq.s32.totalorder %s14, 1
    %p84 = por %p82, %p83
    %p86 = scmp.ne.s32.totalorder %s69, %s85
    %p87 = scmp.eq.s32.totalorder %s14, 0
    %p88 = por %p86, %p87
    %p89 = scmp.le.s32.totalorder 1, %s8
    %p90 = scmp.lt.s32.totalorder %s8, 3
    %p91 = pnand %p89, %p90
    %p92 = pneg %p91
    // Predicated region
    $region9: #{input_layer_forward.2} parent=5 // pred_check
      _
    $region10: #{input_layer_forward.2} parent=5 // pred_check_branch
      %94 = sbr.rel (%p91) target = $region12
    $region11: #{input_layer_forward.2} parent=5 // pred_region
      %s95 = ssub.s32 %s8, 1
      // Predicated region
      $region13: #{input_layer_forward.2} parent=11 // pred_check
        %p96 = pneg %p55
      $region14: #{input_layer_forward.2} parent=11 // pred_check_branch
        %98 = sbr.rel (%p96) target = $region16
      $region15: #{input_layer_forward.2} parent=11 // pred_region
        _
      $region16: #{input_layer_forward.2} parent=11 // pred_fallthru
        _
    $region12: #{input_layer_forward.2} parent=5 // pred_fallthru
      _
    %p99 = scmp.lt.s32.totalorder %s8, 2
    // Predicated region
    $region17: #{input_layer_forward.2} parent=5 // pred_check
      %p100 = pneg %p99
    $region18: #{input_layer_forward.2} parent=5 // pred_check_branch
      %102 = sbr.rel (%p100) target = $region20
    $region19: #{input_layer_forward.2} parent=5 // pred_region
      // Predicated region
      $region21: #{input_layer_forward.2} parent=19 // pred_check
        %p103 = pneg %p28
      $region22: #{input_layer_forward.2} parent=19 // pred_check_branch
        %105 = sbr.rel (%p103) target = $region24
      $region23: #{input_layer_forward.2} parent=19 // pred_region
        %s106 = smul.u32 3, %s8
        %p107 = scmp.lt.s32.totalorder %s106, 5
        %s108 = scalar_select %p107, %s106, 5
        %s109 = smul.addr %s108, 4
        %s110 = scalar_lea.vmem %s0, %s109
        %s111 = smul.u32 3, %s8
      $region24: #{input_layer_forward.2} parent=19 // pred_fallthru
        _
    $region20: #{input_layer_forward.2} parent=5 // pred_fallthru
      _
    %p112 = scmp.le.s32.totalorder 1, %s8
    %p113 = scmp.lt.s32.totalorder %s8, 3
    %p114 = pnand %p112, %p113
    %p115 = pneg %p114
    // Predicated region
    $region25: #{input_layer_forward.2} parent=5 // pred_check
      _
    $region26: #{input_layer_forward.2} parent=5 // pred_check_branch
      %117 = sbr.rel (%p114) target = $region28
    $region27: #{input_layer_forward.2} parent=5 // pred_region
      %s118 = ssub.s32 %s8, 1
      %s119 = smul.u32 3, %s13
      %p120 = scmp.lt.s32.totalorder %s119, 5
      %s121 = scalar_select %p120, %s119, 5
      %s122 = smul.addr %s121, 4
      %s123 = scalar_lea.vmem %s0, %s122
      %p124 = pneg %p34
      %p125 = pneg %p31
      %p126 = pneg %p55
      %p127 = pneg %p52
      %p128 = pneg %p81
      %p129 = pneg %p78
      %p130 = scmp.lt.s32.totalorder %s13, 1
      %s131 = scalar_select %p130, %s13, 1
      %s132 = smul.addr %s131, 8
      %s133 = smul.addr %s132, 8
      %s134 = scalar_lea.vmem %s2, %s133
      %s135 = smul.u32 3, %s13
      %p136 = scmp.lt.s32.totalorder %s135, 5
      %s137 = scalar_select %p136, %s135, 5
      %s138 = smul.addr %s137, 4
      %s139 = scalar_lea.vmem %s0, %s138
      %s140 = smul.u32 3, %s13
      %p141 = scmp.lt.s32.totalorder %s13, 1
      %s142 = scalar_select %p141, %s13, 1
      %s143 = smul.addr %s142, 8
      %s144 = smul.addr %s143, 8
      %s145 = scalar_lea.vmem %s2, %s144
      %v146 = vlaneseq
      %v147 = vand.u32 %v146, 127
      %v148 = vadd.s32 %v147, 128
      %vm149 = vcmp.lt.s32.totalorder %v147, 0
      %v150 = vsub.s32 0, %v147
      %v151 = vsel %vm149, %v150, %v147
      %v152 = vshrl.u32 %v151, 4
      %v153 = vand.u32 %v151, 15
      %v154 = vsub.s32 0, %v153
      %v155 = vsel %vm149, %v154, %v153
      %vm156 = vcmp.lt.s32.totalorder %v148, 0
      %v157 = vsub.s32 0, %v148
      %v158 = vsel %vm156, %v157, %v148
      %v159 = vshrl.u32 %v158, 4
      %v160 = vand.u32 %v158, 15
      %v161 = vsub.s32 0, %v160
      %v162 = vsel %vm156, %v161, %v160
      %vm163 = vcmp.ne.s32.totalorder %v155, 0
      %vm164 = vcmp.ne.s32.totalorder %v162, 0
      %vm165 = vcmp.lt.s32.totalorder %v155, 0
      %vm166 = vcmp.lt.s32.totalorder %v162, 0
      %vm167 = vmand %vm165, %vm163
      %vm168 = vmand %vm166, %vm164
      %v169 = vadd.s32 %v155, 16
      %v170 = vadd.s32 %v162, 16
      %v171 = vsel %vm167, %v169, %v155
      %v172 = vsel %vm168, %v170, %v162
      %vm173 = vcmp.ne.s32.totalorder %v171, 0
      %vm174 = vcmp.ne.s32.totalorder %v172, 0
      %vm175 = vcmp.ne.s32.totalorder %v171, 15
      %vm176 = vcmp.ne.s32.totalorder %v172, 15
      %177 = vst [vmem:[#allocation2 + $0x30] sm:$0xf8] 0.0
      %178 = vst [vmem:[#allocation2 + $0x38] sm:$0xf8] 0.0
      %v179 = vld [vmem:[%s139] sm:$0x77]
      %v180 = vld [vmem:[%s139 + $0x8] sm:$0x7]
      %v181 = vsel %vm173, 1, 0
      %v182 = vsel %vm174, 1, 0
      %vm183 = vcmp.eq.s32.totalorder %v181, 1
      %vm184 = vcmp.eq.s32.totalorder %v182, 1
      %v187 = vcombine.high %v179, %v179
      %188 = vrot.lane.b32.xlu0 %v179, 105
      %v189 = vpop.permute.xlu0 %188
      %190 = vrot.lane.b32.xlu0 %v187, 105
      %v191 = vpop.permute.xlu0 %190
      %192 = vrot.lane.b32.xlu0 %v180, 105
      %v193 = vpop.permute.xlu0 %192
      %vm194 = vcmask 859136
      %v195 = vsel %vm194, %v189, %v191
      %v196 = vsel %vm194, %v191, %v193
      %v199 = vsel %vm183, %v195, 0.0
      %v200 = vsel %vm184, %v196, 0.0
      %201 = vst [vmem:[#allocation2] sm:$0x7] %v199
      %202 = vst [vmem:[#allocation2 + $0x8] sm:$0x7] %v200
      %v203 = vld [vmem:[%s139] sm:$0x77]
      %v204 = vld [vmem:[%s139 + $0x8] sm:$0x7]
      %v207 = vcombine.high %v203, %v203
      %v208 = vrot.slane %v203, 5
      %v209 = vrot.slane %v207, 5
      %v210 = vrot.slane %v204, 5
      %211 = vrot.lane.b32.xlu0 %v208, 104
      %v212 = vpop.permute.xlu0 %211
      %213 = vrot.lane.b32.xlu0 %v209, 104
      %v214 = vpop.permute.xlu0 %213
      %215 = vrot.lane.b32.xlu0 %v210, 104
      %v216 = vpop.permute.xlu0 %215
      %vm217 = vcmask 850944
      %v218 = vsel %vm217, %v212, %v214
      %v219 = vsel %vm217, %v214, %v216
      %222 = vst [vmem:[#allocation2] sm:$0x38] %v218
      %223 = vst [vmem:[#allocation2 + $0x8] sm:$0x38] %v219
      %v224 = vld [vmem:[%s139] sm:$0x77]
      %v225 = vld [vmem:[%s139 + $0x8] sm:$0x7]
      %v226 = vsel %vm175, 1, 0
      %v227 = vsel %vm176, 1, 0
      %vm228 = vcmp.eq.s32.totalorder %v226, 1
      %vm229 = vcmp.eq.s32.totalorder %v227, 1
      %v232 = vcombine.high %v224, %v224
      %233 = vrot.lane.b32.xlu0 %v224, 103
      %v234 = vpop.permute.xlu0 %233
      %235 = vrot.lane.b32.xlu0 %v232, 103
      %v236 = vpop.permute.xlu0 %235
      %237 = vrot.lane.b32.xlu0 %v225, 103
      %v238 = vpop.permute.xlu0 %237
      %vm239 = vcmask 842752
      %v240 = vsel %vm239, %v234, %v236
      %v241 = vsel %vm239, %v236, %v238
      %v244 = vsel %vm228, %v240, 0.0
      %v245 = vsel %vm229, %v241, 0.0
      %v248 = vrot.slane %v244, 2
      %v249 = vrot.slane %v245, 2
      %252 = vst [vmem:[#allocation2] sm:$0xc0] %v248
      %253 = vst [vmem:[#allocation2 + $0x8] sm:$0xc0] %v249
      %254 = vst [vmem:[#allocation2 + $0x10] sm:$0x1] %v248
      %255 = vst [vmem:[#allocation2 + $0x18] sm:$0x1] %v249
      %v256 = vld [vmem:[%s139] sm:$0x77]
      %v257 = vld [vmem:[%s139 + $0x8] sm:$0x7]
      %v260 = vcombine.high %v256, %v256
      %261 = vrot.lane.b32.xlu0 %v256, 89
      %v262 = vpop.permute.xlu0 %261
      %263 = vrot.lane.b32.xlu0 %v260, 89
      %v264 = vpop.permute.xlu0 %263
      %265 = vrot.lane.b32.xlu0 %v257, 89
      %v266 = vpop.permute.xlu0 %265
      %vm267 = vcmask 728064
      %v268 = vsel %vm267, %v262, %v264
      %v269 = vsel %vm267, %v264, %v266
      %v272 = vsel %vm183, %v268, 0.0
      %v273 = vsel %vm184, %v269, 0.0
      %v276 = vrot.slane %v272, 7
      %v277 = vrot.slane %v273, 7
      %280 = vst [vmem:[#allocation2 + $0x10] sm:$0xe] %v276
      %281 = vst [vmem:[#allocation2 + $0x18] sm:$0xe] %v277
      %v282 = vld [vmem:[%s139] sm:$0x77]
      %v283 = vld [vmem:[%s139 + $0x8] sm:$0x7]
      %v286 = vcombine.low %v282, %v282
      %v287 = vcombine.low %v283, %v283
      %288 = vrot.lane.b32.xlu0 %v286, 88
      %v289 = vpop.permute.xlu0 %288
      %290 = vrot.lane.b32.xlu0 %v282, 88
      %v291 = vpop.permute.xlu0 %290
      %292 = vrot.lane.b32.xlu0 %v287, 88
      %v293 = vpop.permute.xlu0 %292
      %vm294 = vcmask 719872
      %v295 = vsel %vm294, %v289, %v291
      %v296 = vsel %vm294, %v291, %v293
      %299 = vst [vmem:[#allocation2 + $0x10] sm:$0x70] %v295
      %300 = vst [vmem:[#allocation2 + $0x18] sm:$0x70] %v296
      %v301 = vld [vmem:[%s139] sm:$0x77]
      %v302 = vld [vmem:[%s139 + $0x8] sm:$0x7]
      %v305 = vcombine.high %v301, %v301
      %306 = vrot.lane.b32.xlu0 %v301, 87
      %v307 = vpop.permute.xlu0 %306
      %308 = vrot.lane.b32.xlu0 %v305, 87
      %v309 = vpop.permute.xlu0 %308
      %310 = vrot.lane.b32.xlu0 %v302, 87
      %v311 = vpop.permute.xlu0 %310
      %vm312 = vcmask 711680
      %v313 = vsel %vm312, %v307, %v309
      %v314 = vsel %vm312, %v309, %v311
      %v317 = vsel %vm228, %v313, 0.0
      %v318 = vsel %vm229, %v314, 0.0
      %v321 = vrot.slane %v317, 1
      %v322 = vrot.slane %v318, 1
      %325 = vst [vmem:[#allocation2 + $0x10] sm:$0x80] %v321
      %326 = vst [vmem:[#allocation2 + $0x18] sm:$0x80] %v322
      %327 = vst [vmem:[#allocation2 + $0x20] sm:$0x3] %v321
      %328 = vst [vmem:[#allocation2 + $0x28] sm:$0x3] %v322
      %v329 = vld [vmem:[%s139] sm:$0x77]
      %v330 = vld [vmem:[%s139 + $0x8] sm:$0x7]
      %v333 = vcombine.high %v329, %v329
      %334 = vrot.lane.b32.xlu0 %v329, 73
      %v335 = vpop.permute.xlu0 %334
      %336 = vrot.lane.b32.xlu0 %v333, 73
      %v337 = vpop.permute.xlu0 %336
      %338 = vrot.lane.b32.xlu0 %v330, 73
      %v339 = vpop.permute.xlu0 %338
      %vm340 = vcmask 596992
      %v341 = vsel %vm340, %v335, %v337
      %v342 = vsel %vm340, %v337, %v339
      %v345 = vsel %vm183, %v341, 0.0
      %v346 = vsel %vm184, %v342, 0.0
      %v349 = vrot.slane %v345, 6
      %v350 = vrot.slane %v346, 6
      %353 = vst [vmem:[#allocation2 + $0x20] sm:$0x1c] %v349
      %354 = vst [vmem:[#allocation2 + $0x28] sm:$0x1c] %v350
      %v355 = vld [vmem:[%s139] sm:$0x77]
      %v356 = vld [vmem:[%s139 + $0x8] sm:$0x7]
      %v359 = vcombine.high %v355, %v355
      %v360 = vrot.slane %v355, 3
      %v361 = vrot.slane %v359, 3
      %v362 = vrot.slane %v356, 3
      %363 = vrot.lane.b32.xlu0 %v360, 72
      %v364 = vpop.permute.xlu0 %363
      %365 = vrot.lane.b32.xlu0 %v361, 72
      %v366 = vpop.permute.xlu0 %365
      %367 = vrot.lane.b32.xlu0 %v362, 72
      %v368 = vpop.permute.xlu0 %367
      %vm369 = vcmask 588800
      %v370 = vsel %vm369, %v364, %v366
      %v371 = vsel %vm369, %v366, %v368
      %374 = vst [vmem:[#allocation2 + $0x20] sm:$0xe0] %v370
      %375 = vst [vmem:[#allocation2 + $0x28] sm:$0xe0] %v371
      %v376 = vld [vmem:[%s139] sm:$0x77]
      %v377 = vld [vmem:[%s139 + $0x8] sm:$0x7]
      %v380 = vcombine.high %v376, %v376
      %381 = vrot.lane.b32.xlu0 %v376, 71
      %v382 = vpop.permute.xlu0 %381
      %383 = vrot.lane.b32.xlu0 %v380, 71
      %v384 = vpop.permute.xlu0 %383
      %385 = vrot.lane.b32.xlu0 %v377, 71
      %v386 = vpop.permute.xlu0 %385
      %vm387 = vcmask 580608
      %v388 = vsel %vm387, %v382, %v384
      %v389 = vsel %vm387, %v384, %v386
      %v392 = vsel %vm228, %v388, 0.0
      %v393 = vsel %vm229, %v389, 0.0
      %394 = vst [vmem:[#allocation2 + $0x30] sm:$0x7] %v392
      %395 = vst [vmem:[#allocation2 + $0x38] sm:$0x7] %v393
      %v396 = vld [vmem:[%s1] sm:$0xff]
      %v397 = vld [vmem:[%s1 + $0x8] sm:$0xff]
      %v398 = vld [vmem:[%s1 + $0x10] sm:$0xff]
      %v399 = vld [vmem:[%s1 + $0x18] sm:$0xff]
      %v400 = vld [vmem:[%s1 + $0x20] sm:$0xff]
      %v401 = vld [vmem:[%s1 + $0x28] sm:$0xff]
      %v402 = vld [vmem:[%s1 + $0x30] sm:$0xff]
      %v403 = vld [vmem:[%s1 + $0x38] sm:$0xff]
      %v404 = vld [vmem:[#allocation2] sm:$0xff]
      %v405 = vld [vmem:[#allocation2 + $0x8] sm:$0xff]
      %v406 = vld [vmem:[#allocation2 + $0x10] sm:$0xff]
      %v407 = vld [vmem:[#allocation2 + $0x18] sm:$0xff]
      %v408 = vld [vmem:[#allocation2 + $0x20] sm:$0xff]
      %v409 = vld [vmem:[#allocation2 + $0x28] sm:$0xff]
      %v410 = vld [vmem:[#allocation2 + $0x30] sm:$0xff]
      %v411 = vld [vmem:[#allocation2 + $0x38] sm:$0xff]
      %vm412 = vcmask 261120
      %v414 = vsel %vm412, %v396, 0
      %v417 = vsel %vm412, %v397, 0
      %v420 = vsel %vm412, %v398, 0
      %v423 = vsel %vm412, %v399, 0
      %v426 = vsel %vm412, %v400, 0
      %v429 = vsel %vm412, %v401, 0
      %v432 = vsel %vm412, %v402, 0
      %v435 = vsel %vm412, %v403, 0
      %437 = vmatprep.subr.mxu0 0.0
      %438 = vmatpush1.msra.mxu0 0.0
      %439 = vmatprep.subr.mxu0 0.0
      %440 = vmatpush1.msra.mxu0 0.0
      %441 = vmatprep.subr.mxu0 0.0
      %442 = vmatpush1.msra.mxu0 0.0
      %443 = vmatprep.subr.mxu0 0.0
      %444 = vmatpush1.msra.mxu0 0.0
      %445 = vmatprep.subr.mxu0 0.0
      %446 = vmatpush1.msra.mxu0 0.0
      %447 = vmatprep.subr.mxu0 0.0
      %448 = vmatpush1.msra.mxu0 0.0
      %449 = vmatprep.subr.mxu0 0.0
      %450 = vmatpush1.msra.mxu0 0.0
      %451 = vmatprep.subr.mxu0 0.0
      %452 = vmatpush1.msra.mxu0 0.0
      %453 = vmatprep.subr.mxu0 0.0
      %454 = vmatpush1.msra.mxu0 0.0
      %455 = vmatprep.subr.mxu0 0.0
      %456 = vmatpush1.msra.mxu0 0.0
      %457 = vmatprep.subr.mxu0 0.0
      %458 = vmatpush1.msra.mxu0 0.0
      %459 = vmatprep.subr.mxu0 0.0
      %460 = vmatpush1.msra.mxu0 0.0
      %461 = vmatprep.subr.mxu0 %v411
      %462 = vmatpush1.msra.mxu0 %v410
      %463 = vmatprep.subr.mxu0 %v409
      %464 = vmatpush1.msra.mxu0 %v408
      %465 = vmatprep.subr.mxu0 %v407
      %466 = vmatpush1.msra.mxu0 %v406
      %467 = vmatprep.subr.mxu0 %v405
      %468 = vmatpush1.msra.mxu0 %v404
      %469 = vmatprep.subr.mxu0 0.0
      %470 = vmatpush2.msra.mxu0 0.0
      %471 = vmatprep.subr.mxu0 0.0
      %472 = vmatpush2.msra.mxu0 0.0
      %473 = vmatprep.subr.mxu0 0.0
      %474 = vmatpush2.msra.mxu0 0.0
      %475 = vmatprep.subr.mxu0 0.0
      %476 = vmatpush2.msra.mxu0 0.0
      %477 = vmatprep.subr.mxu0 0.0
      %478 = vmatpush2.msra.mxu0 0.0
      %479 = vmatprep.subr.mxu0 0.0
      %480 = vmatpush2.msra.mxu0 0.0
      %481 = vmatprep.subr.mxu0 0.0
      %482 = vmatpush2.msra.mxu0 0.0
      %483 = vmatprep.subr.mxu0 0.0
      %484 = vmatpush2.msra.mxu0 0.0
      %485 = vmatprep.subr.mxu0 0.0
      %486 = vmatpush2.msra.mxu0 0.0
      %487 = vmatprep.subr.mxu0 0.0
      %488 = vmatpush2.msra.mxu0 0.0
      %489 = vmatprep.subr.mxu0 0.0
      %490 = vmatpush2.msra.mxu0 0.0
      %491 = vmatprep.subr.mxu0 0.0
      %492 = vmatpush2.msra.mxu0 0.0
      %493 = vmatprep.subr.mxu0 0.0
      %494 = vmatpush2.msra.mxu0 0.0
      %495 = vmatprep.subr.mxu0 0.0
      %496 = vmatpush2.msra.mxu0 0.0
      %497 = vmatprep.subr.mxu0 0.0
      %498 = vmatpush2.msra.mxu0 0.0
      %499 = vmatprep.subr.mxu0 0.0
      %500 = vmatpush2.msra.mxu0 0.0
      %501 = vmatprep.mubr.f32.mxu0 0.0
      %502 = vmatmul.mubr.f32.gmra.mxu0 %v414
      %v503 = vpop.f32.mrf.mxu0
      %v504 = vadd.f32 0.0, %v503
      %v505 = vpop.f32.mrf.mxu0
      %v506 = vadd.f32 0.0, %v505
      %507 = vmatprep.mubr.f32.mxu0 0.0
      %508 = vmatmul.mubr.f32.gmra.mxu0 %v417
      %v509 = vpop.f32.mrf.mxu0
      %v510 = vadd.f32 0.0, %v509
      %v511 = vpop.f32.mrf.mxu0
      %v512 = vadd.f32 0.0, %v511
      %513 = vmatprep.mubr.f32.mxu0 0.0
      %514 = vmatmul.mubr.f32.gmra.mxu0 %v420
      %v515 = vpop.f32.mrf.mxu0
      %v516 = vadd.f32 0.0, %v515
      %v517 = vpop.f32.mrf.mxu0
      %v518 = vadd.f32 0.0, %v517
      %519 = vmatprep.mubr.f32.mxu0 0.0
      %520 = vmatmul.mubr.f32.gmra.mxu0 %v423
      %v521 = vpop.f32.mrf.mxu0
      %v522 = vadd.f32 0.0, %v521
      %v523 = vpop.f32.mrf.mxu0
      %v524 = vadd.f32 0.0, %v523
      %525 = vmatprep.mubr.f32.mxu0 0.0
      %526 = vmatmul.mubr.f32.gmra.mxu0 %v426
      %v527 = vpop.f32.mrf.mxu0
      %v528 = vadd.f32 0.0, %v527
      %v529 = vpop.f32.mrf.mxu0
      %v530 = vadd.f32 0.0, %v529
      %531 = vmatprep.mubr.f32.mxu0 0.0
      %532 = vmatmul.mubr.f32.gmra.mxu0 %v429
      %v533 = vpop.f32.mrf.mxu0
      %v534 = vadd.f32 0.0, %v533
      %v535 = vpop.f32.mrf.mxu0
      %v536 = vadd.f32 0.0, %v535
      %537 = vmatprep.mubr.f32.mxu0 0.0
      %538 = vmatmul.mubr.f32.gmra.mxu0 %v432
      %v539 = vpop.f32.mrf.mxu0
      %v540 = vadd.f32 0.0, %v539
      %v541 = vpop.f32.mrf.mxu0
      %v542 = vadd.f32 0.0, %v541
      %543 = vmatprep.mubr.f32.mxu0 0.0
      %544 = vmatmul.mubr.f32.gmra.mxu0 %v435
      %v545 = vpop.f32.mrf.mxu0
      %v546 = vadd.f32 0.0, %v545
      %v547 = vpop.f32.mrf.mxu0
      %v548 = vadd.f32 0.0, %v547
      %549 = vdwg.mxu0
      %v550 = vadd.f32 %v504, %v506
      %551 = vadd.xlane.f32.xlu0 %v550
      %v552 = vpop.xlane.xlu0 %551
      %v553 = vadd.f32 %v510, %v512
      %554 = vadd.xlane.f32.xlu0 %v553
      %v555 = vpop.xlane.xlu0 %554
      %v556 = vadd.f32 %v516, %v518
      %557 = vadd.xlane.f32.xlu0 %v556
      %v558 = vpop.xlane.xlu0 %557
      %v559 = vadd.f32 %v522, %v524
      %560 = vadd.xlane.f32.xlu0 %v559
      %v561 = vpop.xlane.xlu0 %560
      %v562 = vadd.f32 %v528, %v530
      %563 = vadd.xlane.f32.xlu0 %v562
      %v564 = vpop.xlane.xlu0 %563
      %v565 = vadd.f32 %v534, %v536
      %566 = vadd.xlane.f32.xlu0 %v565
      %v567 = vpop.xlane.xlu0 %566
      %v568 = vadd.f32 %v540, %v542
      %569 = vadd.xlane.f32.xlu0 %v568
      %v570 = vpop.xlane.xlu0 %569
      %v571 = vadd.f32 %v546, %v548
      %572 = vadd.xlane.f32.xlu0 %v571
      %v573 = vpop.xlane.xlu0 %572
      %v574 = vadd.f32 %v552, 0.0
      %v575 = vadd.f32 %v555, 0.0
      %v576 = vadd.f32 %v558, 0.0
      %v577 = vadd.f32 %v561, 0.0
      %v578 = vadd.f32 %v564, 0.0
      %v579 = vadd.f32 %v567, 0.0
      %v580 = vadd.f32 %v570, 0.0
      %v581 = vadd.f32 %v573, 0.0
      %v582 = vmul.f32 %v504, %v504
      %v583 = vmul.f32 %v506, %v506
      %v584 = vmul.f32 %v510, %v510
      %v585 = vmul.f32 %v512, %v512
      %v586 = vmul.f32 %v516, %v516
      %v587 = vmul.f32 %v518, %v518
      %v588 = vmul.f32 %v522, %v522
      %v589 = vmul.f32 %v524, %v524
      %v590 = vmul.f32 %v528, %v528
      %v591 = vmul.f32 %v530, %v530
      %v592 = vmul.f32 %v534, %v534
      %v593 = vmul.f32 %v536, %v536
      %v594 = vmul.f32 %v540, %v540
      %v595 = vmul.f32 %v542, %v542
      %v596 = vmul.f32 %v546, %v546
      %v597 = vmul.f32 %v548, %v548
      %v598 = vadd.f32 %v582, %v583
      %599 = vadd.xlane.f32.xlu0 %v598
      %v600 = vpop.xlane.xlu0 %599
      %v601 = vadd.f32 %v584, %v585
      %602 = vadd.xlane.f32.xlu0 %v601
      %v603 = vpop.xlane.xlu0 %602
      %v604 = vadd.f32 %v586, %v587
      %605 = vadd.xlane.f32.xlu0 %v604
      %v606 = vpop.xlane.xlu0 %605
      %v607 = vadd.f32 %v588, %v589
      %608 = vadd.xlane.f32.xlu0 %v607
      %v609 = vpop.xlane.xlu0 %608
      %v610 = vadd.f32 %v590, %v591
      %611 = vadd.xlane.f32.xlu0 %v610
      %v612 = vpop.xlane.xlu0 %611
      %v613 = vadd.f32 %v592, %v593
      %614 = vadd.xlane.f32.xlu0 %v613
      %v615 = vpop.xlane.xlu0 %614
      %v616 = vadd.f32 %v594, %v595
      %617 = vadd.xlane.f32.xlu0 %v616
      %v618 = vpop.xlane.xlu0 %617
      %v619 = vadd.f32 %v596, %v597
      %620 = vadd.xlane.f32.xlu0 %v619
      %v621 = vpop.xlane.xlu0 %620
      %v622 = vadd.f32 %v600, 0.0
      %v623 = vadd.f32 %v603, 0.0
      %v624 = vadd.f32 %v606, 0.0
      %v625 = vadd.f32 %v609, 0.0
      %v626 = vadd.f32 %v612, 0.0
      %v627 = vadd.f32 %v615, 0.0
      %v628 = vadd.f32 %v618, 0.0
      %v629 = vadd.f32 %v621, 0.0
      %vm630 = vcmask 7168
      %v631 = vsel %vm630, %v574, %v622
      %v632 = vsel %vm630, %v575, %v623
      %v633 = vsel %vm630, %v576, %v624
      %v634 = vsel %vm630, %v577, %v625
      %v635 = vsel %vm630, %v578, %v626
      %v636 = vsel %vm630, %v579, %v627
      %v637 = vsel %vm630, %v580, %v628
      %v638 = vsel %vm630, %v581, %v629
      %vm639 = vcmask 15360
      %640 = vst.msk [vmem:[%s145] sm:$0xff] %vm639, %v631
      %641 = vst.msk [vmem:[%s145 + $0x8] sm:$0xff] %vm639, %v632
      %642 = vst.msk [vmem:[%s145 + $0x10] sm:$0xff] %vm639, %v633
      %643 = vst.msk [vmem:[%s145 + $0x18] sm:$0xff] %vm639, %v634
      %644 = vst.msk [vmem:[%s145 + $0x20] sm:$0xff] %vm639, %v635
      %645 = vst.msk [vmem:[%s145 + $0x28] sm:$0xff] %vm639, %v636
      %646 = vst.msk [vmem:[%s145 + $0x30] sm:$0xff] %vm639, %v637
      %647 = vst.msk [vmem:[%s145 + $0x38] sm:$0xff] %vm639, %v638
      %p648 = scmp.lt.s32.totalorder %s13, 1
      %s649 = scalar_select %p648, %s13, 1
      %s650 = smul.addr %s649, 8
      %s651 = smul.addr %s650, 8
      %s652 = scalar_lea.vmem %s2, %s651
      // Predicated region
      $region29: #{input_layer_forward.2} parent=27 // pred_check
        %p653 = pneg %p78
      $region30: #{input_layer_forward.2} parent=27 // pred_check_branch
        %655 = sbr.rel (%p653) target = $region32
      $region31: #{input_layer_forward.2} parent=27 // pred_region
        _
      $region32: #{input_layer_forward.2} parent=27 // pred_fallthru
        _
    $region28: #{input_layer_forward.2} parent=5 // pred_fallthru
      _
    %p656 = scmp.le.s32.totalorder 2, %s8
    // Predicated region
    $region33: #{input_layer_forward.2} parent=5 // pred_check
      %p657 = pneg %p656
    $region34: #{input_layer_forward.2} parent=5 // pred_check_branch
      %659 = sbr.rel (%p657) target = $region36
    $region35: #{input_layer_forward.2} parent=5 // pred_region
      %s660 = ssub.s32 %s8, 2
      // Predicated region
      $region37: #{input_layer_forward.2} parent=35 // pred_check
        %p661 = pneg %p84
      $region38: #{input_layer_forward.2} parent=35 // pred_check_branch
        %663 = sbr.rel (%p661) target = $region40
      $region39: #{input_layer_forward.2} parent=35 // pred_region
        %p664 = scmp.lt.s32.totalorder %s14, 1
        %s665 = scalar_select %p664, %s14, 1
        %s666 = smul.addr %s665, 8
        %s667 = smul.addr %s666, 8
        %s668 = scalar_lea.vmem %s2, %s667
      $region40: #{input_layer_forward.2} parent=35 // pred_fallthru
        _
    $region36: #{input_layer_forward.2} parent=5 // pred_fallthru
      _
  $region6: #{input_layer_forward.2} parent=0 // loop_footer
    %s12 = sadd.s32 1, %s8
  $region7: #{input_layer_forward.2} parent=0 // loop_footer_branch
    %7 = sbr.rel target = $region3
  $region8: #{input_layer_forward.2} parent=0 // loop_exit
    _

</llo_original>
